<compile_context>
chip_gen: v7x
topology: tpu7x:2x2x1
jax: 0.10.0
libtpu: 0.0.40
codegen_flags: <defaults>
</compile_context>

<pallas_src>
import functools

import jax
import jax.numpy as jnp
from jax.experimental import pallas as pl
from jax.experimental.pallas import tpu as pltpu


# 3x3 tap offsets, row-major: t = (dy + 1) * 3 + (dx + 1)
TAPS = tuple((dy, dx) for dy in (-1, 0, 1) for dx in (-1, 0, 1))


# ----------------------------------------------------------------------------
# In-kernel helpers (operate on (C, H*W) values: channels on sublanes, flat
# pixels on lanes)
# ----------------------------------------------------------------------------
def _shift_flat(v, dy, dx, h, w):
    """Shifted view: u[c, y*w + x] = v[c, (y+dy)*w + (x+dx)], zero outside.

    Static lane slice + zero fill handles the row boundary; a column mask
    handles the dx row-wrap.  No padded activation copy is materialized."""
    if dy == 0 and dx == 0:
        return v
    n = h * w
    off = dy * w + dx
    c = v.shape[0]
    fill = jnp.zeros((c, abs(off)), v.dtype)
    if off > 0:
        u = jnp.concatenate([v[:, off:], fill], axis=1)
    else:
        u = jnp.concatenate([fill, v[:, :n + off]], axis=1)
    if dx == 0:
        return u
    col = jax.lax.broadcasted_iota(jnp.int32, (1, n), 1) % w
    ok = (col >= -dx) if dx < 0 else (col < w - dx)
    return jnp.where(ok, u, 0.0)


def _tap_parity(planes, py, px, dy, dx, ho, wo):
    """Tap (dy,dx) of a stride-2 access anchored at full-res parity (py,px).

    planes[by*2 + bx][c, yo*wo + xo] == fullres[c, 2*yo + by, 2*xo + bx]."""
    ay, by = divmod(py + dy, 2)
    ax, bx = divmod(px + dx, 2)
    return _shift_flat(planes[by * 2 + bx], ay, ax, ho, wo)


def _conv3x3(taps, w_ref, scale_ref, shift_ref, relu):
    """Dense 3x3 conv as ONE MXU matmul over the im2col patch (K = 9*cin)."""
    patch = jnp.concatenate(taps, axis=0).astype(jnp.bfloat16)     # (9*cin, N)
    y = jnp.dot(w_ref[...], patch, preferred_element_type=jnp.float32)
    y = y * scale_ref[...] + shift_ref[...]
    return jnp.maximum(y, 0.0) if relu else y


def _dw_accum(taps, w_taps_ref, row_lo, rows):
    """Depthwise 3x3: VPU multiply-accumulate of the 9 shifted views against
    per-channel taps w_taps_ref[t, row_lo:row_lo+rows, :]."""
    acc = taps[0] * w_taps_ref[0, row_lo:row_lo + rows, :]
    for t in range(1, 9):
        acc = acc + taps[t] * w_taps_ref[t, row_lo:row_lo + rows, :]
    return acc


def _pw(y, w_ref, scale_ref, shift_ref):
    """1x1 conv (+ folded BN / bias) on the MXU, bf16 operands, f32 accumulate."""
    z = jnp.dot(w_ref[...], y.astype(jnp.bfloat16),
                preferred_element_type=jnp.float32)
    return z * scale_ref[...] + shift_ref[...]


# ----------------------------------------------------------------------------
# Fused kernels
# ----------------------------------------------------------------------------
def ge_s1_kernel(x_ref, w1_ref, s1_ref, b1_ref, w2_ref, s2_ref, b2_ref,
                 w3_ref, s3_ref, b3_ref, o_ref, *, h, w, cin, mult):
    """Stride-1 GE layer: 3x3 ConvBNReLU -> DW3x3(xm) BN -> 1x1 ConvBN -> +x -> ReLU."""
    xf = x_ref[0]                                                   # (cin, H*W)

    # L1: dense 3x3 conv + BN + ReLU (one MXU matmul, pixels on lanes).
    taps_x = [_shift_flat(xf, dy, dx, h, w) for dy, dx in TAPS]
    y1 = _conv3x3(taps_x, w1_ref, s1_ref, b1_ref, relu=True)        # (cin, N)

    # L2: depthwise 3x3 with channel multiplier `mult` + BN (pure VPU).
    taps1 = [_shift_flat(y1, dy, dx, h, w) for dy, dx in TAPS]
    blocks = [_dw_accum(taps1, w2_ref, j * cin, cin) for j in range(mult)]
    y2 = blocks[0] if mult == 1 else jnp.concatenate(blocks, axis=0)
    y2 = y2 * s2_ref[...] + b2_ref[...]                             # (hid, N)

    # L3: 1x1 conv + BN (conv bias folded into shift).
    y3 = _pw(y2, w3_ref, s3_ref, b3_ref)                            # (out, N)

    # Residual with the layer input + final ReLU.
    o_ref[0] = jnp.maximum(y3 + xf, 0.0).astype(o_ref.dtype)


def ge_s2_kernel(xq_ref, w1_ref, s1_ref, b1_ref, w2_ref, s2_ref, b2_ref,
                 w3_ref, s3_ref, b3_ref, w4_ref, s4_ref, b4_ref,
                 wr1_ref, sr1_ref, br1_ref, wr2_ref, sr2_ref, br2_ref,
                 o_ref, *, ho, wo, cin, mult):
    """Stride-2 GE layer (left + right branch + add + ReLU), fully fused.

    The input arrives parity-decomposed: xq_ref[0, by*2+bx] holds the full-res
    image at rows 2*yo+by / cols 2*xo+bx flattened to (cin, ho*wo), so the
    stride-2 stages run directly at output resolution."""
    hid = cin * mult
    xq = [xq_ref[0, p] for p in range(4)]                           # 4 x (cin, No)

    # L1: dense 3x3 stride-1 conv at full resolution, produced as 4 parity
    # planes (one small MXU matmul per parity).
    y1 = []
    for py in (0, 1):
        for px in (0, 1):
            taps = [_tap_parity(xq, py, px, dy, dx, ho, wo) for dy, dx in TAPS]
            y1.append(_conv3x3(taps, w1_ref, s1_ref, b1_ref, relu=True))

    # L2: depthwise 3x3, stride 2, channel multiplier `mult` + BN.
    taps2 = [_tap_parity(y1, 0, 0, dy, dx, ho, wo) for dy, dx in TAPS]
    blocks = [_dw_accum(taps2, w2_ref, j * cin, cin) for j in range(mult)]
    y2 = blocks[0] if mult == 1 else jnp.concatenate(blocks, axis=0)
    y2 = y2 * s2_ref[...] + b2_ref[...]                             # (hid, No)

    # L3: depthwise 3x3, stride 1, at quarter resolution + BN.
    taps3 = [_shift_flat(y2, dy, dx, ho, wo) for dy, dx in TAPS]
    y3 = _dw_accum(taps3, w3_ref, 0, hid) * s3_ref[...] + b3_ref[...]

    # L4: 1x1 conv + BN (bias folded).
    y4 = _pw(y3, w4_ref, s4_ref, b4_ref)                            # (out, No)

    # Right branch: depthwise 3x3 stride 2 on x + BN, then 1x1 conv + BN.
    tapsr = [_tap_parity(xq, 0, 0, dy, dx, ho, wo) for dy, dx in TAPS]
    r1 = _dw_accum(tapsr, wr1_ref, 0, cin) * sr1_ref[...] + br1_ref[...]
    r2 = _pw(r1, wr2_ref, sr2_ref, br2_ref)                         # (out, No)

    o_ref[0] = jnp.maximum(y4 + r2, 0.0).astype(o_ref.dtype)


# ----------------------------------------------------------------------------
# pallas_call plumbing (glue)
# ----------------------------------------------------------------------------
def _batched_spec_shape(shape):
    rank = len(shape)
    zeros = (0,) * (rank - 1)

    def imap(b):
        return (b,) + zeros

    return pl.BlockSpec((1,) + tuple(shape[1:]), imap)


def _shared_spec(a):
    zeros = (0,) * a.ndim

    def imap(b):
        return zeros

    return pl.BlockSpec(a.shape, imap)


def _run_fused(kernel, args, out_shape):
    b = args[0].shape[0]
    in_specs = [_batched_spec_shape(args[0].shape)] + [
        _shared_spec(a) for a in args[1:]]
    return pl.pallas_call(
        kernel,
        out_shape=jax.ShapeDtypeStruct(out_shape, jnp.float32),
        grid_spec=pltpu.PrefetchScalarGridSpec(
            num_scalar_prefetch=0,
            grid=(b,),
            in_specs=in_specs,
            out_specs=_batched_spec_shape(out_shape),
        ),
        compiler_params=pltpu.CompilerParams(
            dimension_semantics=("parallel",)),
    )(*args)


# ----------------------------------------------------------------------------
# Parameter setup (deterministic, glue)
# ----------------------------------------------------------------------------
def _fold_bn(key, cout, conv_bias=None, eps=1e-5):
    k1, k2, k3, k4 = jax.random.split(key, 4)
    gamma = jax.random.uniform(k1, (cout,), jnp.float32, 0.5, 1.5)
    beta = jax.random.normal(k2, (cout,), jnp.float32) * 0.1
    mean = jax.random.normal(k3, (cout,), jnp.float32) * 0.1
    var = jax.random.uniform(k4, (cout,), jnp.float32, 0.5, 1.5)
    scale = gamma / jnp.sqrt(var + eps)
    shift = beta - scale * mean
    if conv_bias is not None:
        shift = shift + scale * conv_bias
    return scale, shift


def _dense3x3_to_flat(w):
    """(O, I, 3, 3) torch conv weight -> (O, 9*I); columns ordered (tap, in_ch)."""
    o, i = w.shape[0], w.shape[1]
    return jnp.transpose(w, (0, 2, 3, 1)).reshape(o, 9 * i)


def _dw_to_taps(w, perm=None):
    """(C, 1, 3, 3) depthwise weight -> (9, C, 1) per-tap per-channel scalars,
    channels optionally permuted to the kernel's tiled order."""
    wt = w[:, 0]
    if perm is not None:
        wt = wt[perm]
    c = wt.shape[0]
    return jnp.transpose(wt, (1, 2, 0)).reshape(9, c, 1)


def _col(v, perm=None):
    if perm is not None:
        v = v[perm]
    return v.reshape(-1, 1).astype(jnp.float32)


def init_ge_layer_params(key, in_ch, out_ch, stride, expand_ratio=6):
    """Random eval-mode parameters in PyTorch layout for a GatherExpansionLayer."""
    hid = int(round(in_ch * expand_ratio))
    ks = iter(jax.random.split(key, 16))

    def conv_w(shape, s):
        return jax.random.normal(next(ks), shape, jnp.float32) * s

    p = {"stride": stride, "in_ch": in_ch, "out_ch": out_ch, "hid": hid}
    p["w1"] = conv_w((in_ch, in_ch, 3, 3), 0.15)
    p["s1"], p["b1"] = _fold_bn(next(ks), in_ch)
    p["w2"] = conv_w((hid, 1, 3, 3), 0.2)
    p["s2"], p["b2"] = _fold_bn(next(ks), hid)
    if stride == 2:
        p["w3"] = conv_w((hid, 1, 3, 3), 0.2)
        p["s3"], p["b3"] = _fold_bn(next(ks), hid)
        p["w4"] = conv_w((out_ch, hid, 1, 1), 0.1)
        b4 = jax.random.normal(next(ks), (out_ch,), jnp.float32) * 0.1
        p["s4"], p["b4"] = _fold_bn(next(ks), out_ch, conv_bias=b4)
        p["wr1"] = conv_w((in_ch, 1, 3, 3), 0.2)
        p["sr1"], p["br1"] = _fold_bn(next(ks), in_ch)
        p["wr2"] = conv_w((out_ch, in_ch, 1, 1), 0.2)
        br2 = jax.random.normal(next(ks), (out_ch,), jnp.float32) * 0.1
        p["sr2"], p["br2"] = _fold_bn(next(ks), out_ch, conv_bias=br2)
    else:
        p["w3"] = conv_w((out_ch, hid, 1, 1), 0.1)
        b3 = jax.random.normal(next(ks), (out_ch,), jnp.float32) * 0.1
        p["s3"], p["b3"] = _fold_bn(next(ks), out_ch, conv_bias=b3)
    return p


# ----------------------------------------------------------------------------
# GatherExpansionLayer forward (Pallas path); input/output NCHW like PyTorch.
# ----------------------------------------------------------------------------
def ge_layer_forward(params, x_nchw):
    b, c, h, w = x_nchw.shape
    assert c == params["in_ch"]
    out_ch, hid = params["out_ch"], params["hid"]
    mult = hid // c
    assert mult * c == hid
    # Tiled channel order: position j*c + ci <-> torch channel ci*mult + j.
    perm = (jnp.arange(hid) % c) * mult + jnp.arange(hid) // c

    if params["stride"] == 2:
        assert h % 2 == 0 and w % 2 == 0
        ho, wo = h // 2, w // 2
        no = ho * wo
        # Parity-plane decomposition of the input (layout plumbing).
        xq = x_nchw.reshape(b, c, ho, 2, wo, 2)
        xq = jnp.transpose(xq, (0, 3, 5, 1, 2, 4)).reshape(b, 4, c, no)
        args = [
            xq,
            _dense3x3_to_flat(params["w1"]).astype(jnp.bfloat16),
            _col(params["s1"]), _col(params["b1"]),
            _dw_to_taps(params["w2"], perm),
            _col(params["s2"], perm), _col(params["b2"], perm),
            _dw_to_taps(params["w3"], perm),
            _col(params["s3"], perm), _col(params["b3"], perm),
            params["w4"][:, :, 0, 0][:, perm].astype(jnp.bfloat16),
            _col(params["s4"]), _col(params["b4"]),
            _dw_to_taps(params["wr1"]),
            _col(params["sr1"]), _col(params["br1"]),
            params["wr2"][:, :, 0, 0].astype(jnp.bfloat16),
            _col(params["sr2"]), _col(params["br2"]),
        ]
        kern = functools.partial(ge_s2_kernel, ho=ho, wo=wo, cin=c, mult=mult)
        out = _run_fused(kern, args, (b, out_ch, no))
        return out.reshape(b, out_ch, ho, wo)

    assert out_ch == c, "stride=1 GE layer adds the input residual"
    n = h * w
    xf = x_nchw.reshape(b, c, n)                     # NCHW -> (B, C, H*W): free
    args = [
        xf,
        _dense3x3_to_flat(params["w1"]).astype(jnp.bfloat16),
        _col(params["s1"]), _col(params["b1"]),
        _dw_to_taps(params["w2"], perm),
        _col(params["s2"], perm), _col(params["b2"], perm),
        params["w3"][:, :, 0, 0][:, perm].astype(jnp.bfloat16),
        _col(params["s3"]), _col(params["b3"]),
    ]
    kern = functools.partial(ge_s1_kernel, h=h, w=w, cin=c, mult=mult)
    out = _run_fused(kern, args, (b, out_ch, n))
    return out.reshape(b, out_ch, h, w)


# ----------------------------------------------------------------------------
# Pure-JAX reference (correctness check only)
# ----------------------------------------------------------------------------
def _ref_convbn(x, w, scale, shift, stride, padding, groups, relu):
    y = jax.lax.conv_general_dilated(
        x, w, (stride, stride), [(padding, padding), (padding, padding)],
        dimension_numbers=("NCHW", "OIHW", "NCHW"),
        feature_group_count=groups)
    y = y * scale[None, :, None, None] + shift[None, :, None, None]
    return jnp.maximum(y, 0.0) if relu else y


def ge_layer_reference(p, x):
    c, hid = p["in_ch"], p["hid"]
    y = _ref_convbn(x, p["w1"], p["s1"], p["b1"], 1, 1, 1, True)
    if p["stride"] == 2:
        y = _ref_convbn(y, p["w2"], p["s2"], p["b2"], 2, 1, c, False)
        y = _ref_convbn(y, p["w3"], p["s3"], p["b3"], 1, 1, hid, False)
        y = _ref_convbn(y, p["w4"], p["s4"], p["b4"], 1, 0, 1, False)
        r = _ref_convbn(x, p["wr1"], p["sr1"], p["br1"], 2, 1, c, False)
        r = _ref_convbn(r, p["wr2"], p["sr2"], p["br2"], 1, 0, 1, False)
        return jnp.maximum(y + r, 0.0)
    y = _ref_convbn(y, p["w2"], p["s2"], p["b2"], 1, 1, c, False)
    y = _ref_convbn(y, p["w3"], p["s3"], p["b3"], 1, 0, 1, False)
    return jnp.maximum(x + y, 0.0)


# ----------------------------------------------------------------------------
if __name__ == "__main__":
    key = jax.random.PRNGKey(0)
    kx, kp1, kp2 = jax.random.split(key, 3)

    B, C, H, W = 2, 8, 16, 16
    x = jax.random.normal(kx, (B, C, H, W), dtype=jnp.float32)   # NCHW, like PyTorch

    # stride=1 variant (residual with the input: in_channels == out_channels)
    p1 = init_ge_layer_params(kp1, C, C, stride=1)
    out1 = ge_layer_forward(p1, x)
    ref1 = ge_layer_reference(p1, x)

    # stride=2 variant (left + right branches)
    p2 = init_ge_layer_params(kp2, C, 16, stride=2)
    out2 = ge_layer_forward(p2, x)
    ref2 = ge_layer_reference(p2, x)

    jax.block_until_ready((out1, out2, ref1, ref2))

    assert out1.shape == (B, C, H, W), out1.shape
    assert out2.shape == (B, 16, H // 2, W // 2), out2.shape
    err1 = float(jnp.max(jnp.abs(out1 - ref1)))
    err2 = float(jnp.max(jnp.abs(out2 - ref2)))
    # Matmul operands are bf16 (f32 accumulation) -> tolerance looser than f32.
    assert jnp.allclose(out1, ref1, rtol=5e-2, atol=5e-2), f"stride=1 max err {err1}"
    assert jnp.allclose(out2, ref2, rtol=5e-2, atol=5e-2), f"stride=2 max err {err2}"

    print("KERNEL_OK")
</pallas_src>

<mosaic_0001>
module attributes {stable_mosaic.version = 11 : i64} {
  func.func @ge_s1_kernel(%arg0: i32, %arg1: memref<1x8x256xf32, #tpu.memory_space<vmem>>, %arg2: memref<8x72xbf16, #tpu.memory_space<vmem>>, %arg3: memref<8x1xf32, #tpu.memory_space<vmem>>, %arg4: memref<8x1xf32, #tpu.memory_space<vmem>>, %arg5: memref<9x48x1xf32, #tpu.memory_space<vmem>>, %arg6: memref<48x1xf32, #tpu.memory_space<vmem>>, %arg7: memref<48x1xf32, #tpu.memory_space<vmem>>, %arg8: memref<8x48xbf16, #tpu.memory_space<vmem>>, %arg9: memref<8x1xf32, #tpu.memory_space<vmem>>, %arg10: memref<8x1xf32, #tpu.memory_space<vmem>>, %arg11: memref<1x8x256xf32, #tpu.memory_space<vmem>>) attributes {dimension_semantics = [#tpu.dimension_semantics<parallel>], iteration_bounds = array<i64: 2>, scalar_prefetch = 0 : i64, scratch_operands = 0 : i64, tpu.core_type = #tpu.core_type<tc>, window_params = [{transform_indices = @transform_0, window_bounds = array<i64: 1, 8, 256>}, {pipeline_mode = #tpu.pipeline_mode<synchronous>, transform_indices = @transform_1, window_bounds = array<i64: 8, 72>}, {pipeline_mode = #tpu.pipeline_mode<synchronous>, transform_indices = @transform_2, window_bounds = array<i64: 8, 1>}, {pipeline_mode = #tpu.pipeline_mode<synchronous>, transform_indices = @transform_3, window_bounds = array<i64: 8, 1>}, {pipeline_mode = #tpu.pipeline_mode<synchronous>, transform_indices = @transform_4, window_bounds = array<i64: 9, 48, 1>}, {pipeline_mode = #tpu.pipeline_mode<synchronous>, transform_indices = @transform_5, window_bounds = array<i64: 48, 1>}, {pipeline_mode = #tpu.pipeline_mode<synchronous>, transform_indices = @transform_6, window_bounds = array<i64: 48, 1>}, {pipeline_mode = #tpu.pipeline_mode<synchronous>, transform_indices = @transform_7, window_bounds = array<i64: 8, 48>}, {pipeline_mode = #tpu.pipeline_mode<synchronous>, transform_indices = @transform_8, window_bounds = array<i64: 8, 1>}, {pipeline_mode = #tpu.pipeline_mode<synchronous>, transform_indices = @transform_9, window_bounds = array<i64: 8, 1>}, {transform_indices = @transform_10, window_bounds = array<i64: 1, 8, 256>}]} {
    %c0 = arith.constant 0 : index
    %c0_0 = arith.constant 0 : index
    %c0_1 = arith.constant 0 : index
    %0 = vector.load %arg1[%c0, %c0_0, %c0_1] : memref<1x8x256xf32, #tpu.memory_space<vmem>>, vector<1x8x256xf32>
    %1 = vector.shape_cast %0 : vector<1x8x256xf32> to vector<8x256xf32>
    %cst = arith.constant 0.000000e+00 : f32
    %2 = vector.broadcast %cst : f32 to vector<8x17xf32>
    %3 = vector.extract_strided_slice %1 {offsets = [0, 0], sizes = [8, 239], strides = [1, 1]} : vector<8x256xf32> to vector<8x239xf32>
    %4 = tpu.concatenate %2, %3 in 1 : vector<8x17xf32>, vector<8x239xf32> -> vector<8x256xf32>
    %5 = tpu.iota {dimensions = array<i32: 1>} : vector<1x256xi32>
    %c16_i32 = arith.constant 16 : i32
    %c0_i32 = arith.constant 0 : i32
    %6 = arith.cmpi eq, %c16_i32, %c0_i32 : i32
    %c1_i32 = arith.constant 1 : i32
    %7 = arith.select %6, %c1_i32, %c16_i32 : i32
    %8 = vector.broadcast %7 : i32 to vector<1x256xi32>
    %9 = arith.remsi %5, %8 : vector<1x256xi32>
    %c0_i32_2 = arith.constant 0 : i32
    %10 = vector.broadcast %c0_i32_2 : i32 to vector<1x256xi32>
    %11 = arith.cmpi ne, %9, %10 : vector<1x256xi32>
    %c0_i32_3 = arith.constant 0 : i32
    %12 = vector.broadcast %c0_i32_3 : i32 to vector<1x256xi32>
    %13 = arith.cmpi slt, %9, %12 : vector<1x256xi32>
    %c0_i32_4 = arith.constant 0 : i32
    %14 = arith.cmpi slt, %7, %c0_i32_4 : i32
    %15 = vector.broadcast %14 : i1 to vector<1x256xi1>
    %16 = vector.broadcast %15 : vector<1x256xi1> to vector<1x256xi1>
    %17 = arith.xori %13, %16 : vector<1x256xi1>
    %18 = arith.andi %17, %11 : vector<1x256xi1>
    %19 = vector.broadcast %7 : i32 to vector<1x256xi32>
    %20 = arith.addi %9, %19 : vector<1x256xi32>
    %21 = arith.select %18, %20, %9 : vector<1x256xi1>, vector<1x256xi32>
    %c1_i32_5 = arith.constant 1 : i32
    %22 = vector.broadcast %c1_i32_5 : i32 to vector<1x256xi32>
    %23 = arith.cmpi sge, %21, %22 : vector<1x256xi32>
    %cst_6 = arith.constant 0.000000e+00 : f32
    %24 = vector.shape_cast %23 : vector<1x256xi1> to vector<1x256xi1>
    %25 = vector.broadcast %24 : vector<1x256xi1> to vector<8x256xi1>
    %26 = vector.broadcast %cst_6 : f32 to vector<8x256xf32>
    %27 = arith.select %25, %4, %26 : vector<8x256xi1>, vector<8x256xf32>
    %cst_7 = arith.constant 0.000000e+00 : f32
    %28 = vector.broadcast %cst_7 : f32 to vector<8x16xf32>
    %29 = vector.extract_strided_slice %1 {offsets = [0, 0], sizes = [8, 240], strides = [1, 1]} : vector<8x256xf32> to vector<8x240xf32>
    %30 = tpu.concatenate %28, %29 in 1 : vector<8x16xf32>, vector<8x240xf32> -> vector<8x256xf32>
    %cst_8 = arith.constant 0.000000e+00 : f32
    %31 = vector.broadcast %cst_8 : f32 to vector<8x15xf32>
    %32 = vector.extract_strided_slice %1 {offsets = [0, 0], sizes = [8, 241], strides = [1, 1]} : vector<8x256xf32> to vector<8x241xf32>
    %33 = tpu.concatenate %31, %32 in 1 : vector<8x15xf32>, vector<8x241xf32> -> vector<8x256xf32>
    %34 = tpu.iota {dimensions = array<i32: 1>} : vector<1x256xi32>
    %c16_i32_9 = arith.constant 16 : i32
    %c0_i32_10 = arith.constant 0 : i32
    %35 = arith.cmpi eq, %c16_i32_9, %c0_i32_10 : i32
    %c1_i32_11 = arith.constant 1 : i32
    %36 = arith.select %35, %c1_i32_11, %c16_i32_9 : i32
    %37 = vector.broadcast %36 : i32 to vector<1x256xi32>
    %38 = arith.remsi %34, %37 : vector<1x256xi32>
    %c0_i32_12 = arith.constant 0 : i32
    %39 = vector.broadcast %c0_i32_12 : i32 to vector<1x256xi32>
    %40 = arith.cmpi ne, %38, %39 : vector<1x256xi32>
    %c0_i32_13 = arith.constant 0 : i32
    %41 = vector.broadcast %c0_i32_13 : i32 to vector<1x256xi32>
    %42 = arith.cmpi slt, %38, %41 : vector<1x256xi32>
    %c0_i32_14 = arith.constant 0 : i32
    %43 = arith.cmpi slt, %36, %c0_i32_14 : i32
    %44 = vector.broadcast %43 : i1 to vector<1x256xi1>
    %45 = vector.broadcast %44 : vector<1x256xi1> to vector<1x256xi1>
    %46 = arith.xori %42, %45 : vector<1x256xi1>
    %47 = arith.andi %46, %40 : vector<1x256xi1>
    %48 = vector.broadcast %36 : i32 to vector<1x256xi32>
    %49 = arith.addi %38, %48 : vector<1x256xi32>
    %50 = arith.select %47, %49, %38 : vector<1x256xi1>, vector<1x256xi32>
    %c15_i32 = arith.constant 15 : i32
    %51 = vector.broadcast %c15_i32 : i32 to vector<1x256xi32>
    %52 = arith.cmpi slt, %50, %51 : vector<1x256xi32>
    %cst_15 = arith.constant 0.000000e+00 : f32
    %53 = vector.shape_cast %52 : vector<1x256xi1> to vector<1x256xi1>
    %54 = vector.broadcast %53 : vector<1x256xi1> to vector<8x256xi1>
    %55 = vector.broadcast %cst_15 : f32 to vector<8x256xf32>
    %56 = arith.select %54, %33, %55 : vector<8x256xi1>, vector<8x256xf32>
    %cst_16 = arith.constant 0.000000e+00 : f32
    %57 = vector.broadcast %cst_16 : f32 to vector<8x1xf32>
    %58 = vector.extract_strided_slice %1 {offsets = [0, 0], sizes = [8, 255], strides = [1, 1]} : vector<8x256xf32> to vector<8x255xf32>
    %59 = tpu.concatenate %57, %58 in 1 : vector<8x1xf32>, vector<8x255xf32> -> vector<8x256xf32>
    %60 = tpu.iota {dimensions = array<i32: 1>} : vector<1x256xi32>
    %c16_i32_17 = arith.constant 16 : i32
    %c0_i32_18 = arith.constant 0 : i32
    %61 = arith.cmpi eq, %c16_i32_17, %c0_i32_18 : i32
    %c1_i32_19 = arith.constant 1 : i32
    %62 = arith.select %61, %c1_i32_19, %c16_i32_17 : i32
    %63 = vector.broadcast %62 : i32 to vector<1x256xi32>
    %64 = arith.remsi %60, %63 : vector<1x256xi32>
    %c0_i32_20 = arith.constant 0 : i32
    %65 = vector.broadcast %c0_i32_20 : i32 to vector<1x256xi32>
    %66 = arith.cmpi ne, %64, %65 : vector<1x256xi32>
    %c0_i32_21 = arith.constant 0 : i32
    %67 = vector.broadcast %c0_i32_21 : i32 to vector<1x256xi32>
    %68 = arith.cmpi slt, %64, %67 : vector<1x256xi32>
    %c0_i32_22 = arith.constant 0 : i32
    %69 = arith.cmpi slt, %62, %c0_i32_22 : i32
    %70 = vector.broadcast %69 : i1 to vector<1x256xi1>
    %71 = vector.broadcast %70 : vector<1x256xi1> to vector<1x256xi1>
    %72 = arith.xori %68, %71 : vector<1x256xi1>
    %73 = arith.andi %72, %66 : vector<1x256xi1>
    %74 = vector.broadcast %62 : i32 to vector<1x256xi32>
    %75 = arith.addi %64, %74 : vector<1x256xi32>
    %76 = arith.select %73, %75, %64 : vector<1x256xi1>, vector<1x256xi32>
    %c1_i32_23 = arith.constant 1 : i32
    %77 = vector.broadcast %c1_i32_23 : i32 to vector<1x256xi32>
    %78 = arith.cmpi sge, %76, %77 : vector<1x256xi32>
    %cst_24 = arith.constant 0.000000e+00 : f32
    %79 = vector.shape_cast %78 : vector<1x256xi1> to vector<1x256xi1>
    %80 = vector.broadcast %79 : vector<1x256xi1> to vector<8x256xi1>
    %81 = vector.broadcast %cst_24 : f32 to vector<8x256xf32>
    %82 = arith.select %80, %59, %81 : vector<8x256xi1>, vector<8x256xf32>
    %cst_25 = arith.constant 0.000000e+00 : f32
    %83 = vector.broadcast %cst_25 : f32 to vector<8x1xf32>
    %84 = vector.extract_strided_slice %1 {offsets = [0, 1], sizes = [8, 255], strides = [1, 1]} : vector<8x256xf32> to vector<8x255xf32>
    %85 = tpu.concatenate %84, %83 in 1 : vector<8x255xf32>, vector<8x1xf32> -> vector<8x256xf32>
    %86 = tpu.iota {dimensions = array<i32: 1>} : vector<1x256xi32>
    %c16_i32_26 = arith.constant 16 : i32
    %c0_i32_27 = arith.constant 0 : i32
    %87 = arith.cmpi eq, %c16_i32_26, %c0_i32_27 : i32
    %c1_i32_28 = arith.constant 1 : i32
    %88 = arith.select %87, %c1_i32_28, %c16_i32_26 : i32
    %89 = vector.broadcast %88 : i32 to vector<1x256xi32>
    %90 = arith.remsi %86, %89 : vector<1x256xi32>
    %c0_i32_29 = arith.constant 0 : i32
    %91 = vector.broadcast %c0_i32_29 : i32 to vector<1x256xi32>
    %92 = arith.cmpi ne, %90, %91 : vector<1x256xi32>
    %c0_i32_30 = arith.constant 0 : i32
    %93 = vector.broadcast %c0_i32_30 : i32 to vector<1x256xi32>
    %94 = arith.cmpi slt, %90, %93 : vector<1x256xi32>
    %c0_i32_31 = arith.constant 0 : i32
    %95 = arith.cmpi slt, %88, %c0_i32_31 : i32
    %96 = vector.broadcast %95 : i1 to vector<1x256xi1>
    %97 = vector.broadcast %96 : vector<1x256xi1> to vector<1x256xi1>
    %98 = arith.xori %94, %97 : vector<1x256xi1>
    %99 = arith.andi %98, %92 : vector<1x256xi1>
    %100 = vector.broadcast %88 : i32 to vector<1x256xi32>
    %101 = arith.addi %90, %100 : vector<1x256xi32>
    %102 = arith.select %99, %101, %90 : vector<1x256xi1>, vector<1x256xi32>
    %c15_i32_32 = arith.constant 15 : i32
    %103 = vector.broadcast %c15_i32_32 : i32 to vector<1x256xi32>
    %104 = arith.cmpi slt, %102, %103 : vector<1x256xi32>
    %cst_33 = arith.constant 0.000000e+00 : f32
    %105 = vector.shape_cast %104 : vector<1x256xi1> to vector<1x256xi1>
    %106 = vector.broadcast %105 : vector<1x256xi1> to vector<8x256xi1>
    %107 = vector.broadcast %cst_33 : f32 to vector<8x256xf32>
    %108 = arith.select %106, %85, %107 : vector<8x256xi1>, vector<8x256xf32>
    %cst_34 = arith.constant 0.000000e+00 : f32
    %109 = vector.broadcast %cst_34 : f32 to vector<8x15xf32>
    %110 = vector.extract_strided_slice %1 {offsets = [0, 15], sizes = [8, 241], strides = [1, 1]} : vector<8x256xf32> to vector<8x241xf32>
    %111 = tpu.concatenate %110, %109 in 1 : vector<8x241xf32>, vector<8x15xf32> -> vector<8x256xf32>
    %112 = tpu.iota {dimensions = array<i32: 1>} : vector<1x256xi32>
    %c16_i32_35 = arith.constant 16 : i32
    %c0_i32_36 = arith.constant 0 : i32
    %113 = arith.cmpi eq, %c16_i32_35, %c0_i32_36 : i32
    %c1_i32_37 = arith.constant 1 : i32
    %114 = arith.select %113, %c1_i32_37, %c16_i32_35 : i32
    %115 = vector.broadcast %114 : i32 to vector<1x256xi32>
    %116 = arith.remsi %112, %115 : vector<1x256xi32>
    %c0_i32_38 = arith.constant 0 : i32
    %117 = vector.broadcast %c0_i32_38 : i32 to vector<1x256xi32>
    %118 = arith.cmpi ne, %116, %117 : vector<1x256xi32>
    %c0_i32_39 = arith.constant 0 : i32
    %119 = vector.broadcast %c0_i32_39 : i32 to vector<1x256xi32>
    %120 = arith.cmpi slt, %116, %119 : vector<1x256xi32>
    %c0_i32_40 = arith.constant 0 : i32
    %121 = arith.cmpi slt, %114, %c0_i32_40 : i32
    %122 = vector.broadcast %121 : i1 to vector<1x256xi1>
    %123 = vector.broadcast %122 : vector<1x256xi1> to vector<1x256xi1>
    %124 = arith.xori %120, %123 : vector<1x256xi1>
    %125 = arith.andi %124, %118 : vector<1x256xi1>
    %126 = vector.broadcast %114 : i32 to vector<1x256xi32>
    %127 = arith.addi %116, %126 : vector<1x256xi32>
    %128 = arith.select %125, %127, %116 : vector<1x256xi1>, vector<1x256xi32>
    %c1_i32_41 = arith.constant 1 : i32
    %129 = vector.broadcast %c1_i32_41 : i32 to vector<1x256xi32>
    %130 = arith.cmpi sge, %128, %129 : vector<1x256xi32>
    %cst_42 = arith.constant 0.000000e+00 : f32
    %131 = vector.shape_cast %130 : vector<1x256xi1> to vector<1x256xi1>
    %132 = vector.broadcast %131 : vector<1x256xi1> to vector<8x256xi1>
    %133 = vector.broadcast %cst_42 : f32 to vector<8x256xf32>
    %134 = arith.select %132, %111, %133 : vector<8x256xi1>, vector<8x256xf32>
    %cst_43 = arith.constant 0.000000e+00 : f32
    %135 = vector.broadcast %cst_43 : f32 to vector<8x16xf32>
    %136 = vector.extract_strided_slice %1 {offsets = [0, 16], sizes = [8, 240], strides = [1, 1]} : vector<8x256xf32> to vector<8x240xf32>
    %137 = tpu.concatenate %136, %135 in 1 : vector<8x240xf32>, vector<8x16xf32> -> vector<8x256xf32>
    %cst_44 = arith.constant 0.000000e+00 : f32
    %138 = vector.broadcast %cst_44 : f32 to vector<8x17xf32>
    %139 = vector.extract_strided_slice %1 {offsets = [0, 17], sizes = [8, 239], strides = [1, 1]} : vector<8x256xf32> to vector<8x239xf32>
    %140 = tpu.concatenate %139, %138 in 1 : vector<8x239xf32>, vector<8x17xf32> -> vector<8x256xf32>
    %141 = tpu.iota {dimensions = array<i32: 1>} : vector<1x256xi32>
    %c16_i32_45 = arith.constant 16 : i32
    %c0_i32_46 = arith.constant 0 : i32
    %142 = arith.cmpi eq, %c16_i32_45, %c0_i32_46 : i32
    %c1_i32_47 = arith.constant 1 : i32
    %143 = arith.select %142, %c1_i32_47, %c16_i32_45 : i32
    %144 = vector.broadcast %143 : i32 to vector<1x256xi32>
    %145 = arith.remsi %141, %144 : vector<1x256xi32>
    %c0_i32_48 = arith.constant 0 : i32
    %146 = vector.broadcast %c0_i32_48 : i32 to vector<1x256xi32>
    %147 = arith.cmpi ne, %145, %146 : vector<1x256xi32>
    %c0_i32_49 = arith.constant 0 : i32
    %148 = vector.broadcast %c0_i32_49 : i32 to vector<1x256xi32>
    %149 = arith.cmpi slt, %145, %148 : vector<1x256xi32>
    %c0_i32_50 = arith.constant 0 : i32
    %150 = arith.cmpi slt, %143, %c0_i32_50 : i32
    %151 = vector.broadcast %150 : i1 to vector<1x256xi1>
    %152 = vector.broadcast %151 : vector<1x256xi1> to vector<1x256xi1>
    %153 = arith.xori %149, %152 : vector<1x256xi1>
    %154 = arith.andi %153, %147 : vector<1x256xi1>
    %155 = vector.broadcast %143 : i32 to vector<1x256xi32>
    %156 = arith.addi %145, %155 : vector<1x256xi32>
    %157 = arith.select %154, %156, %145 : vector<1x256xi1>, vector<1x256xi32>
    %c15_i32_51 = arith.constant 15 : i32
    %158 = vector.broadcast %c15_i32_51 : i32 to vector<1x256xi32>
    %159 = arith.cmpi slt, %157, %158 : vector<1x256xi32>
    %cst_52 = arith.constant 0.000000e+00 : f32
    %160 = vector.shape_cast %159 : vector<1x256xi1> to vector<1x256xi1>
    %161 = vector.broadcast %160 : vector<1x256xi1> to vector<8x256xi1>
    %162 = vector.broadcast %cst_52 : f32 to vector<8x256xf32>
    %163 = arith.select %161, %140, %162 : vector<8x256xi1>, vector<8x256xf32>
    %164 = tpu.concatenate %27, %30, %56, %82, %1, %108, %134, %137, %163 in 0 : vector<8x256xf32>, vector<8x256xf32>, vector<8x256xf32>, vector<8x256xf32>, vector<8x256xf32>, vector<8x256xf32>, vector<8x256xf32>, vector<8x256xf32>, vector<8x256xf32> -> vector<72x256xf32>
    %165 = arith.truncf %164 : vector<72x256xf32> to vector<72x256xbf16>
    %c0_53 = arith.constant 0 : index
    %c0_54 = arith.constant 0 : index
    %166 = vector.load %arg2[%c0_53, %c0_54] : memref<8x72xbf16, #tpu.memory_space<vmem>>, vector<8x72xbf16>
    %cst_55 = arith.constant dense<0.000000e+00> : vector<8x256xf32>
    %167 = tpu.matmul %166, %165, %cst_55 {dimension_numbers = #tpu.dot_dimension_numbers<[1], [0], [0], [1], [0, 0, 1, 1], [], []>} : vector<8x72xbf16>, vector<72x256xbf16>, vector<8x256xf32> -> vector<8x256xf32>
    %c0_56 = arith.constant 0 : index
    %c0_57 = arith.constant 0 : index
    %168 = vector.load %arg3[%c0_56, %c0_57] : memref<8x1xf32, #tpu.memory_space<vmem>>, vector<8x1xf32>
    %169 = vector.broadcast %168 : vector<8x1xf32> to vector<8x256xf32>
    %170 = arith.mulf %167, %169 : vector<8x256xf32>
    %c0_58 = arith.constant 0 : index
    %c0_59 = arith.constant 0 : index
    %171 = vector.load %arg4[%c0_58, %c0_59] : memref<8x1xf32, #tpu.memory_space<vmem>>, vector<8x1xf32>
    %172 = vector.broadcast %171 : vector<8x1xf32> to vector<8x256xf32>
    %173 = arith.addf %170, %172 : vector<8x256xf32>
    %cst_60 = arith.constant 0.000000e+00 : f32
    %174 = vector.broadcast %cst_60 : f32 to vector<8x256xf32>
    %175 = arith.maximumf %173, %174 : vector<8x256xf32>
    %cst_61 = arith.constant 0.000000e+00 : f32
    %176 = vector.broadcast %cst_61 : f32 to vector<8x17xf32>
    %177 = vector.extract_strided_slice %175 {offsets = [0, 0], sizes = [8, 239], strides = [1, 1]} : vector<8x256xf32> to vector<8x239xf32>
    %178 = tpu.concatenate %176, %177 in 1 : vector<8x17xf32>, vector<8x239xf32> -> vector<8x256xf32>
    %179 = tpu.iota {dimensions = array<i32: 1>} : vector<1x256xi32>
    %c16_i32_62 = arith.constant 16 : i32
    %c0_i32_63 = arith.constant 0 : i32
    %180 = arith.cmpi eq, %c16_i32_62, %c0_i32_63 : i32
    %c1_i32_64 = arith.constant 1 : i32
    %181 = arith.select %180, %c1_i32_64, %c16_i32_62 : i32
    %182 = vector.broadcast %181 : i32 to vector<1x256xi32>
    %183 = arith.remsi %179, %182 : vector<1x256xi32>
    %c0_i32_65 = arith.constant 0 : i32
    %184 = vector.broadcast %c0_i32_65 : i32 to vector<1x256xi32>
    %185 = arith.cmpi ne, %183, %184 : vector<1x256xi32>
    %c0_i32_66 = arith.constant 0 : i32
    %186 = vector.broadcast %c0_i32_66 : i32 to vector<1x256xi32>
    %187 = arith.cmpi slt, %183, %186 : vector<1x256xi32>
    %c0_i32_67 = arith.constant 0 : i32
    %188 = arith.cmpi slt, %181, %c0_i32_67 : i32
    %189 = vector.broadcast %188 : i1 to vector<1x256xi1>
    %190 = vector.broadcast %189 : vector<1x256xi1> to vector<1x256xi1>
    %191 = arith.xori %187, %190 : vector<1x256xi1>
    %192 = arith.andi %191, %185 : vector<1x256xi1>
    %193 = vector.broadcast %181 : i32 to vector<1x256xi32>
    %194 = arith.addi %183, %193 : vector<1x256xi32>
    %195 = arith.select %192, %194, %183 : vector<1x256xi1>, vector<1x256xi32>
    %c1_i32_68 = arith.constant 1 : i32
    %196 = vector.broadcast %c1_i32_68 : i32 to vector<1x256xi32>
    %197 = arith.cmpi sge, %195, %196 : vector<1x256xi32>
    %cst_69 = arith.constant 0.000000e+00 : f32
    %198 = vector.shape_cast %197 : vector<1x256xi1> to vector<1x256xi1>
    %199 = vector.broadcast %198 : vector<1x256xi1> to vector<8x256xi1>
    %200 = vector.broadcast %cst_69 : f32 to vector<8x256xf32>
    %201 = arith.select %199, %178, %200 : vector<8x256xi1>, vector<8x256xf32>
    %cst_70 = arith.constant 0.000000e+00 : f32
    %202 = vector.broadcast %cst_70 : f32 to vector<8x16xf32>
    %203 = vector.extract_strided_slice %175 {offsets = [0, 0], sizes = [8, 240], strides = [1, 1]} : vector<8x256xf32> to vector<8x240xf32>
    %204 = tpu.concatenate %202, %203 in 1 : vector<8x16xf32>, vector<8x240xf32> -> vector<8x256xf32>
    %cst_71 = arith.constant 0.000000e+00 : f32
    %205 = vector.broadcast %cst_71 : f32 to vector<8x15xf32>
    %206 = vector.extract_strided_slice %175 {offsets = [0, 0], sizes = [8, 241], strides = [1, 1]} : vector<8x256xf32> to vector<8x241xf32>
    %207 = tpu.concatenate %205, %206 in 1 : vector<8x15xf32>, vector<8x241xf32> -> vector<8x256xf32>
    %208 = tpu.iota {dimensions = array<i32: 1>} : vector<1x256xi32>
    %c16_i32_72 = arith.constant 16 : i32
    %c0_i32_73 = arith.constant 0 : i32
    %209 = arith.cmpi eq, %c16_i32_72, %c0_i32_73 : i32
    %c1_i32_74 = arith.constant 1 : i32
    %210 = arith.select %209, %c1_i32_74, %c16_i32_72 : i32
    %211 = vector.broadcast %210 : i32 to vector<1x256xi32>
    %212 = arith.remsi %208, %211 : vector<1x256xi32>
    %c0_i32_75 = arith.constant 0 : i32
    %213 = vector.broadcast %c0_i32_75 : i32 to vector<1x256xi32>
    %214 = arith.cmpi ne, %212, %213 : vector<1x256xi32>
    %c0_i32_76 = arith.constant 0 : i32
    %215 = vector.broadcast %c0_i32_76 : i32 to vector<1x256xi32>
    %216 = arith.cmpi slt, %212, %215 : vector<1x256xi32>
    %c0_i32_77 = arith.constant 0 : i32
    %217 = arith.cmpi slt, %210, %c0_i32_77 : i32
    %218 = vector.broadcast %217 : i1 to vector<1x256xi1>
    %219 = vector.broadcast %218 : vector<1x256xi1> to vector<1x256xi1>
    %220 = arith.xori %216, %219 : vector<1x256xi1>
    %221 = arith.andi %220, %214 : vector<1x256xi1>
    %222 = vector.broadcast %210 : i32 to vector<1x256xi32>
    %223 = arith.addi %212, %222 : vector<1x256xi32>
    %224 = arith.select %221, %223, %212 : vector<1x256xi1>, vector<1x256xi32>
    %c15_i32_78 = arith.constant 15 : i32
    %225 = vector.broadcast %c15_i32_78 : i32 to vector<1x256xi32>
    %226 = arith.cmpi slt, %224, %225 : vector<1x256xi32>
    %cst_79 = arith.constant 0.000000e+00 : f32
    %227 = vector.shape_cast %226 : vector<1x256xi1> to vector<1x256xi1>
    %228 = vector.broadcast %227 : vector<1x256xi1> to vector<8x256xi1>
    %229 = vector.broadcast %cst_79 : f32 to vector<8x256xf32>
    %230 = arith.select %228, %207, %229 : vector<8x256xi1>, vector<8x256xf32>
    %cst_80 = arith.constant 0.000000e+00 : f32
    %231 = vector.broadcast %cst_80 : f32 to vector<8x1xf32>
    %232 = vector.extract_strided_slice %175 {offsets = [0, 0], sizes = [8, 255], strides = [1, 1]} : vector<8x256xf32> to vector<8x255xf32>
    %233 = tpu.concatenate %231, %232 in 1 : vector<8x1xf32>, vector<8x255xf32> -> vector<8x256xf32>
    %234 = tpu.iota {dimensions = array<i32: 1>} : vector<1x256xi32>
    %c16_i32_81 = arith.constant 16 : i32
    %c0_i32_82 = arith.constant 0 : i32
    %235 = arith.cmpi eq, %c16_i32_81, %c0_i32_82 : i32
    %c1_i32_83 = arith.constant 1 : i32
    %236 = arith.select %235, %c1_i32_83, %c16_i32_81 : i32
    %237 = vector.broadcast %236 : i32 to vector<1x256xi32>
    %238 = arith.remsi %234, %237 : vector<1x256xi32>
    %c0_i32_84 = arith.constant 0 : i32
    %239 = vector.broadcast %c0_i32_84 : i32 to vector<1x256xi32>
    %240 = arith.cmpi ne, %238, %239 : vector<1x256xi32>
    %c0_i32_85 = arith.constant 0 : i32
    %241 = vector.broadcast %c0_i32_85 : i32 to vector<1x256xi32>
    %242 = arith.cmpi slt, %238, %241 : vector<1x256xi32>
    %c0_i32_86 = arith.constant 0 : i32
    %243 = arith.cmpi slt, %236, %c0_i32_86 : i32
    %244 = vector.broadcast %243 : i1 to vector<1x256xi1>
    %245 = vector.broadcast %244 : vector<1x256xi1> to vector<1x256xi1>
    %246 = arith.xori %242, %245 : vector<1x256xi1>
    %247 = arith.andi %246, %240 : vector<1x256xi1>
    %248 = vector.broadcast %236 : i32 to vector<1x256xi32>
    %249 = arith.addi %238, %248 : vector<1x256xi32>
    %250 = arith.select %247, %249, %238 : vector<1x256xi1>, vector<1x256xi32>
    %c1_i32_87 = arith.constant 1 : i32
    %251 = vector.broadcast %c1_i32_87 : i32 to vector<1x256xi32>
    %252 = arith.cmpi sge, %250, %251 : vector<1x256xi32>
    %cst_88 = arith.constant 0.000000e+00 : f32
    %253 = vector.shape_cast %252 : vector<1x256xi1> to vector<1x256xi1>
    %254 = vector.broadcast %253 : vector<1x256xi1> to vector<8x256xi1>
    %255 = vector.broadcast %cst_88 : f32 to vector<8x256xf32>
    %256 = arith.select %254, %233, %255 : vector<8x256xi1>, vector<8x256xf32>
    %cst_89 = arith.constant 0.000000e+00 : f32
    %257 = vector.broadcast %cst_89 : f32 to vector<8x1xf32>
    %258 = vector.extract_strided_slice %175 {offsets = [0, 1], sizes = [8, 255], strides = [1, 1]} : vector<8x256xf32> to vector<8x255xf32>
    %259 = tpu.concatenate %258, %257 in 1 : vector<8x255xf32>, vector<8x1xf32> -> vector<8x256xf32>
    %260 = tpu.iota {dimensions = array<i32: 1>} : vector<1x256xi32>
    %c16_i32_90 = arith.constant 16 : i32
    %c0_i32_91 = arith.constant 0 : i32
    %261 = arith.cmpi eq, %c16_i32_90, %c0_i32_91 : i32
    %c1_i32_92 = arith.constant 1 : i32
    %262 = arith.select %261, %c1_i32_92, %c16_i32_90 : i32
    %263 = vector.broadcast %262 : i32 to vector<1x256xi32>
    %264 = arith.remsi %260, %263 : vector<1x256xi32>
    %c0_i32_93 = arith.constant 0 : i32
    %265 = vector.broadcast %c0_i32_93 : i32 to vector<1x256xi32>
    %266 = arith.cmpi ne, %264, %265 : vector<1x256xi32>
    %c0_i32_94 = arith.constant 0 : i32
    %267 = vector.broadcast %c0_i32_94 : i32 to vector<1x256xi32>
    %268 = arith.cmpi slt, %264, %267 : vector<1x256xi32>
    %c0_i32_95 = arith.constant 0 : i32
    %269 = arith.cmpi slt, %262, %c0_i32_95 : i32
    %270 = vector.broadcast %269 : i1 to vector<1x256xi1>
    %271 = vector.broadcast %270 : vector<1x256xi1> to vector<1x256xi1>
    %272 = arith.xori %268, %271 : vector<1x256xi1>
    %273 = arith.andi %272, %266 : vector<1x256xi1>
    %274 = vector.broadcast %262 : i32 to vector<1x256xi32>
    %275 = arith.addi %264, %274 : vector<1x256xi32>
    %276 = arith.select %273, %275, %264 : vector<1x256xi1>, vector<1x256xi32>
    %c15_i32_96 = arith.constant 15 : i32
    %277 = vector.broadcast %c15_i32_96 : i32 to vector<1x256xi32>
    %278 = arith.cmpi slt, %276, %277 : vector<1x256xi32>
    %cst_97 = arith.constant 0.000000e+00 : f32
    %279 = vector.shape_cast %278 : vector<1x256xi1> to vector<1x256xi1>
    %280 = vector.broadcast %279 : vector<1x256xi1> to vector<8x256xi1>
    %281 = vector.broadcast %cst_97 : f32 to vector<8x256xf32>
    %282 = arith.select %280, %259, %281 : vector<8x256xi1>, vector<8x256xf32>
    %cst_98 = arith.constant 0.000000e+00 : f32
    %283 = vector.broadcast %cst_98 : f32 to vector<8x15xf32>
    %284 = vector.extract_strided_slice %175 {offsets = [0, 15], sizes = [8, 241], strides = [1, 1]} : vector<8x256xf32> to vector<8x241xf32>
    %285 = tpu.concatenate %284, %283 in 1 : vector<8x241xf32>, vector<8x15xf32> -> vector<8x256xf32>
    %286 = tpu.iota {dimensions = array<i32: 1>} : vector<1x256xi32>
    %c16_i32_99 = arith.constant 16 : i32
    %c0_i32_100 = arith.constant 0 : i32
    %287 = arith.cmpi eq, %c16_i32_99, %c0_i32_100 : i32
    %c1_i32_101 = arith.constant 1 : i32
    %288 = arith.select %287, %c1_i32_101, %c16_i32_99 : i32
    %289 = vector.broadcast %288 : i32 to vector<1x256xi32>
    %290 = arith.remsi %286, %289 : vector<1x256xi32>
    %c0_i32_102 = arith.constant 0 : i32
    %291 = vector.broadcast %c0_i32_102 : i32 to vector<1x256xi32>
    %292 = arith.cmpi ne, %290, %291 : vector<1x256xi32>
    %c0_i32_103 = arith.constant 0 : i32
    %293 = vector.broadcast %c0_i32_103 : i32 to vector<1x256xi32>
    %294 = arith.cmpi slt, %290, %293 : vector<1x256xi32>
    %c0_i32_104 = arith.constant 0 : i32
    %295 = arith.cmpi slt, %288, %c0_i32_104 : i32
    %296 = vector.broadcast %295 : i1 to vector<1x256xi1>
    %297 = vector.broadcast %296 : vector<1x256xi1> to vector<1x256xi1>
    %298 = arith.xori %294, %297 : vector<1x256xi1>
    %299 = arith.andi %298, %292 : vector<1x256xi1>
    %300 = vector.broadcast %288 : i32 to vector<1x256xi32>
    %301 = arith.addi %290, %300 : vector<1x256xi32>
    %302 = arith.select %299, %301, %290 : vector<1x256xi1>, vector<1x256xi32>
    %c1_i32_105 = arith.constant 1 : i32
    %303 = vector.broadcast %c1_i32_105 : i32 to vector<1x256xi32>
    %304 = arith.cmpi sge, %302, %303 : vector<1x256xi32>
    %cst_106 = arith.constant 0.000000e+00 : f32
    %305 = vector.shape_cast %304 : vector<1x256xi1> to vector<1x256xi1>
    %306 = vector.broadcast %305 : vector<1x256xi1> to vector<8x256xi1>
    %307 = vector.broadcast %cst_106 : f32 to vector<8x256xf32>
    %308 = arith.select %306, %285, %307 : vector<8x256xi1>, vector<8x256xf32>
    %cst_107 = arith.constant 0.000000e+00 : f32
    %309 = vector.broadcast %cst_107 : f32 to vector<8x16xf32>
    %310 = vector.extract_strided_slice %175 {offsets = [0, 16], sizes = [8, 240], strides = [1, 1]} : vector<8x256xf32> to vector<8x240xf32>
    %311 = tpu.concatenate %310, %309 in 1 : vector<8x240xf32>, vector<8x16xf32> -> vector<8x256xf32>
    %cst_108 = arith.constant 0.000000e+00 : f32
    %312 = vector.broadcast %cst_108 : f32 to vector<8x17xf32>
    %313 = vector.extract_strided_slice %175 {offsets = [0, 17], sizes = [8, 239], strides = [1, 1]} : vector<8x256xf32> to vector<8x239xf32>
    %314 = tpu.concatenate %313, %312 in 1 : vector<8x239xf32>, vector<8x17xf32> -> vector<8x256xf32>
    %315 = tpu.iota {dimensions = array<i32: 1>} : vector<1x256xi32>
    %c16_i32_109 = arith.constant 16 : i32
    %c0_i32_110 = arith.constant 0 : i32
    %316 = arith.cmpi eq, %c16_i32_109, %c0_i32_110 : i32
    %c1_i32_111 = arith.constant 1 : i32
    %317 = arith.select %316, %c1_i32_111, %c16_i32_109 : i32
    %318 = vector.broadcast %317 : i32 to vector<1x256xi32>
    %319 = arith.remsi %315, %318 : vector<1x256xi32>
    %c0_i32_112 = arith.constant 0 : i32
    %320 = vector.broadcast %c0_i32_112 : i32 to vector<1x256xi32>
    %321 = arith.cmpi ne, %319, %320 : vector<1x256xi32>
    %c0_i32_113 = arith.constant 0 : i32
    %322 = vector.broadcast %c0_i32_113 : i32 to vector<1x256xi32>
    %323 = arith.cmpi slt, %319, %322 : vector<1x256xi32>
    %c0_i32_114 = arith.constant 0 : i32
    %324 = arith.cmpi slt, %317, %c0_i32_114 : i32
    %325 = vector.broadcast %324 : i1 to vector<1x256xi1>
    %326 = vector.broadcast %325 : vector<1x256xi1> to vector<1x256xi1>
    %327 = arith.xori %323, %326 : vector<1x256xi1>
    %328 = arith.andi %327, %321 : vector<1x256xi1>
    %329 = vector.broadcast %317 : i32 to vector<1x256xi32>
    %330 = arith.addi %319, %329 : vector<1x256xi32>
    %331 = arith.select %328, %330, %319 : vector<1x256xi1>, vector<1x256xi32>
    %c15_i32_115 = arith.constant 15 : i32
    %332 = vector.broadcast %c15_i32_115 : i32 to vector<1x256xi32>
    %333 = arith.cmpi slt, %331, %332 : vector<1x256xi32>
    %cst_116 = arith.constant 0.000000e+00 : f32
    %334 = vector.shape_cast %333 : vector<1x256xi1> to vector<1x256xi1>
    %335 = vector.broadcast %334 : vector<1x256xi1> to vector<8x256xi1>
    %336 = vector.broadcast %cst_116 : f32 to vector<8x256xf32>
    %337 = arith.select %335, %314, %336 : vector<8x256xi1>, vector<8x256xf32>
    %c0_117 = arith.constant 0 : index
    %c0_118 = arith.constant 0 : index
    %c0_119 = arith.constant 0 : index
    %338 = vector.load %arg5[%c0_117, %c0_118, %c0_119] : memref<9x48x1xf32, #tpu.memory_space<vmem>>, vector<1x8x1xf32>
    %339 = vector.shape_cast %338 : vector<1x8x1xf32> to vector<8x1xf32>
    %340 = vector.broadcast %339 : vector<8x1xf32> to vector<8x256xf32>
    %341 = arith.mulf %201, %340 : vector<8x256xf32>
    %c1 = arith.constant 1 : index
    %c0_120 = arith.constant 0 : index
    %c0_121 = arith.constant 0 : index
    %342 = vector.load %arg5[%c1, %c0_120, %c0_121] : memref<9x48x1xf32, #tpu.memory_space<vmem>>, vector<1x8x1xf32>
    %343 = vector.shape_cast %342 : vector<1x8x1xf32> to vector<8x1xf32>
    %344 = vector.broadcast %343 : vector<8x1xf32> to vector<8x256xf32>
    %345 = arith.mulf %204, %344 : vector<8x256xf32>
    %346 = arith.addf %341, %345 : vector<8x256xf32>
    %c2 = arith.constant 2 : index
    %c0_122 = arith.constant 0 : index
    %c0_123 = arith.constant 0 : index
    %347 = vector.load %arg5[%c2, %c0_122, %c0_123] : memref<9x48x1xf32, #tpu.memory_space<vmem>>, vector<1x8x1xf32>
    %348 = vector.shape_cast %347 : vector<1x8x1xf32> to vector<8x1xf32>
    %349 = vector.broadcast %348 : vector<8x1xf32> to vector<8x256xf32>
    %350 = arith.mulf %230, %349 : vector<8x256xf32>
    %351 = arith.addf %346, %350 : vector<8x256xf32>
    %c3 = arith.constant 3 : index
    %c0_124 = arith.constant 0 : index
    %c0_125 = arith.constant 0 : index
    %352 = vector.load %arg5[%c3, %c0_124, %c0_125] : memref<9x48x1xf32, #tpu.memory_space<vmem>>, vector<1x8x1xf32>
    %353 = vector.shape_cast %352 : vector<1x8x1xf32> to vector<8x1xf32>
    %354 = vector.broadcast %353 : vector<8x1xf32> to vector<8x256xf32>
    %355 = arith.mulf %256, %354 : vector<8x256xf32>
    %356 = arith.addf %351, %355 : vector<8x256xf32>
    %c4 = arith.constant 4 : index
    %c0_126 = arith.constant 0 : index
    %c0_127 = arith.constant 0 : index
    %357 = vector.load %arg5[%c4, %c0_126, %c0_127] : memref<9x48x1xf32, #tpu.memory_space<vmem>>, vector<1x8x1xf32>
    %358 = vector.shape_cast %357 : vector<1x8x1xf32> to vector<8x1xf32>
    %359 = vector.broadcast %358 : vector<8x1xf32> to vector<8x256xf32>
    %360 = arith.mulf %175, %359 : vector<8x256xf32>
    %361 = arith.addf %356, %360 : vector<8x256xf32>
    %c5 = arith.constant 5 : index
    %c0_128 = arith.constant 0 : index
    %c0_129 = arith.constant 0 : index
    %362 = vector.load %arg5[%c5, %c0_128, %c0_129] : memref<9x48x1xf32, #tpu.memory_space<vmem>>, vector<1x8x1xf32>
    %363 = vector.shape_cast %362 : vector<1x8x1xf32> to vector<8x1xf32>
    %364 = vector.broadcast %363 : vector<8x1xf32> to vector<8x256xf32>
    %365 = arith.mulf %282, %364 : vector<8x256xf32>
    %366 = arith.addf %361, %365 : vector<8x256xf32>
    %c6 = arith.constant 6 : index
    %c0_130 = arith.constant 0 : index
    %c0_131 = arith.constant 0 : index
    %367 = vector.load %arg5[%c6, %c0_130, %c0_131] : memref<9x48x1xf32, #tpu.memory_space<vmem>>, vector<1x8x1xf32>
    %368 = vector.shape_cast %367 : vector<1x8x1xf32> to vector<8x1xf32>
    %369 = vector.broadcast %368 : vector<8x1xf32> to vector<8x256xf32>
    %370 = arith.mulf %308, %369 : vector<8x256xf32>
    %371 = arith.addf %366, %370 : vector<8x256xf32>
    %c7 = arith.constant 7 : index
    %c0_132 = arith.constant 0 : index
    %c0_133 = arith.constant 0 : index
    %372 = vector.load %arg5[%c7, %c0_132, %c0_133] : memref<9x48x1xf32, #tpu.memory_space<vmem>>, vector<1x8x1xf32>
    %373 = vector.shape_cast %372 : vector<1x8x1xf32> to vector<8x1xf32>
    %374 = vector.broadcast %373 : vector<8x1xf32> to vector<8x256xf32>
    %375 = arith.mulf %311, %374 : vector<8x256xf32>
    %376 = arith.addf %371, %375 : vector<8x256xf32>
    %c8 = arith.constant 8 : index
    %c0_134 = arith.constant 0 : index
    %c0_135 = arith.constant 0 : index
    %377 = vector.load %arg5[%c8, %c0_134, %c0_135] : memref<9x48x1xf32, #tpu.memory_space<vmem>>, vector<1x8x1xf32>
    %378 = vector.shape_cast %377 : vector<1x8x1xf32> to vector<8x1xf32>
    %379 = vector.broadcast %378 : vector<8x1xf32> to vector<8x256xf32>
    %380 = arith.mulf %337, %379 : vector<8x256xf32>
    %381 = arith.addf %376, %380 : vector<8x256xf32>
    %c0_136 = arith.constant 0 : index
    %c8_137 = arith.constant 8 : index
    %c0_138 = arith.constant 0 : index
    %382 = vector.load %arg5[%c0_136, %c8_137, %c0_138] : memref<9x48x1xf32, #tpu.memory_space<vmem>>, vector<1x8x1xf32>
    %383 = vector.shape_cast %382 : vector<1x8x1xf32> to vector<8x1xf32>
    %384 = vector.broadcast %383 : vector<8x1xf32> to vector<8x256xf32>
    %385 = arith.mulf %201, %384 : vector<8x256xf32>
    %c1_139 = arith.constant 1 : index
    %c8_140 = arith.constant 8 : index
    %c0_141 = arith.constant 0 : index
    %386 = vector.load %arg5[%c1_139, %c8_140, %c0_141] : memref<9x48x1xf32, #tpu.memory_space<vmem>>, vector<1x8x1xf32>
    %387 = vector.shape_cast %386 : vector<1x8x1xf32> to vector<8x1xf32>
    %388 = vector.broadcast %387 : vector<8x1xf32> to vector<8x256xf32>
    %389 = arith.mulf %204, %388 : vector<8x256xf32>
    %390 = arith.addf %385, %389 : vector<8x256xf32>
    %c2_142 = arith.constant 2 : index
    %c8_143 = arith.constant 8 : index
    %c0_144 = arith.constant 0 : index
    %391 = vector.load %arg5[%c2_142, %c8_143, %c0_144] : memref<9x48x1xf32, #tpu.memory_space<vmem>>, vector<1x8x1xf32>
    %392 = vector.shape_cast %391 : vector<1x8x1xf32> to vector<8x1xf32>
    %393 = vector.broadcast %392 : vector<8x1xf32> to vector<8x256xf32>
    %394 = arith.mulf %230, %393 : vector<8x256xf32>
    %395 = arith.addf %390, %394 : vector<8x256xf32>
    %c3_145 = arith.constant 3 : index
    %c8_146 = arith.constant 8 : index
    %c0_147 = arith.constant 0 : index
    %396 = vector.load %arg5[%c3_145, %c8_146, %c0_147] : memref<9x48x1xf32, #tpu.memory_space<vmem>>, vector<1x8x1xf32>
    %397 = vector.shape_cast %396 : vector<1x8x1xf32> to vector<8x1xf32>
    %398 = vector.broadcast %397 : vector<8x1xf32> to vector<8x256xf32>
    %399 = arith.mulf %256, %398 : vector<8x256xf32>
    %400 = arith.addf %395, %399 : vector<8x256xf32>
    %c4_148 = arith.constant 4 : index
    %c8_149 = arith.constant 8 : index
    %c0_150 = arith.constant 0 : index
    %401 = vector.load %arg5[%c4_148, %c8_149, %c0_150] : memref<9x48x1xf32, #tpu.memory_space<vmem>>, vector<1x8x1xf32>
    %402 = vector.shape_cast %401 : vector<1x8x1xf32> to vector<8x1xf32>
    %403 = vector.broadcast %402 : vector<8x1xf32> to vector<8x256xf32>
    %404 = arith.mulf %175, %403 : vector<8x256xf32>
    %405 = arith.addf %400, %404 : vector<8x256xf32>
    %c5_151 = arith.constant 5 : index
    %c8_152 = arith.constant 8 : index
    %c0_153 = arith.constant 0 : index
    %406 = vector.load %arg5[%c5_151, %c8_152, %c0_153] : memref<9x48x1xf32, #tpu.memory_space<vmem>>, vector<1x8x1xf32>
    %407 = vector.shape_cast %406 : vector<1x8x1xf32> to vector<8x1xf32>
    %408 = vector.broadcast %407 : vector<8x1xf32> to vector<8x256xf32>
    %409 = arith.mulf %282, %408 : vector<8x256xf32>
    %410 = arith.addf %405, %409 : vector<8x256xf32>
    %c6_154 = arith.constant 6 : index
    %c8_155 = arith.constant 8 : index
    %c0_156 = arith.constant 0 : index
    %411 = vector.load %arg5[%c6_154, %c8_155, %c0_156] : memref<9x48x1xf32, #tpu.memory_space<vmem>>, vector<1x8x1xf32>
    %412 = vector.shape_cast %411 : vector<1x8x1xf32> to vector<8x1xf32>
    %413 = vector.broadcast %412 : vector<8x1xf32> to vector<8x256xf32>
    %414 = arith.mulf %308, %413 : vector<8x256xf32>
    %415 = arith.addf %410, %414 : vector<8x256xf32>
    %c7_157 = arith.constant 7 : index
    %c8_158 = arith.constant 8 : index
    %c0_159 = arith.constant 0 : index
    %416 = vector.load %arg5[%c7_157, %c8_158, %c0_159] : memref<9x48x1xf32, #tpu.memory_space<vmem>>, vector<1x8x1xf32>
    %417 = vector.shape_cast %416 : vector<1x8x1xf32> to vector<8x1xf32>
    %418 = vector.broadcast %417 : vector<8x1xf32> to vector<8x256xf32>
    %419 = arith.mulf %311, %418 : vector<8x256xf32>
    %420 = arith.addf %415, %419 : vector<8x256xf32>
    %c8_160 = arith.constant 8 : index
    %c8_161 = arith.constant 8 : index
    %c0_162 = arith.constant 0 : index
    %421 = vector.load %arg5[%c8_160, %c8_161, %c0_162] : memref<9x48x1xf32, #tpu.memory_space<vmem>>, vector<1x8x1xf32>
    %422 = vector.shape_cast %421 : vector<1x8x1xf32> to vector<8x1xf32>
    %423 = vector.broadcast %422 : vector<8x1xf32> to vector<8x256xf32>
    %424 = arith.mulf %337, %423 : vector<8x256xf32>
    %425 = arith.addf %420, %424 : vector<8x256xf32>
    %c0_163 = arith.constant 0 : index
    %c16 = arith.constant 16 : index
    %c0_164 = arith.constant 0 : index
    %426 = vector.load %arg5[%c0_163, %c16, %c0_164] : memref<9x48x1xf32, #tpu.memory_space<vmem>>, vector<1x8x1xf32>
    %427 = vector.shape_cast %426 : vector<1x8x1xf32> to vector<8x1xf32>
    %428 = vector.broadcast %427 : vector<8x1xf32> to vector<8x256xf32>
    %429 = arith.mulf %201, %428 : vector<8x256xf32>
    %c1_165 = arith.constant 1 : index
    %c16_166 = arith.constant 16 : index
    %c0_167 = arith.constant 0 : index
    %430 = vector.load %arg5[%c1_165, %c16_166, %c0_167] : memref<9x48x1xf32, #tpu.memory_space<vmem>>, vector<1x8x1xf32>
    %431 = vector.shape_cast %430 : vector<1x8x1xf32> to vector<8x1xf32>
    %432 = vector.broadcast %431 : vector<8x1xf32> to vector<8x256xf32>
    %433 = arith.mulf %204, %432 : vector<8x256xf32>
    %434 = arith.addf %429, %433 : vector<8x256xf32>
    %c2_168 = arith.constant 2 : index
    %c16_169 = arith.constant 16 : index
    %c0_170 = arith.constant 0 : index
    %435 = vector.load %arg5[%c2_168, %c16_169, %c0_170] : memref<9x48x1xf32, #tpu.memory_space<vmem>>, vector<1x8x1xf32>
    %436 = vector.shape_cast %435 : vector<1x8x1xf32> to vector<8x1xf32>
    %437 = vector.broadcast %436 : vector<8x1xf32> to vector<8x256xf32>
    %438 = arith.mulf %230, %437 : vector<8x256xf32>
    %439 = arith.addf %434, %438 : vector<8x256xf32>
    %c3_171 = arith.constant 3 : index
    %c16_172 = arith.constant 16 : index
    %c0_173 = arith.constant 0 : index
    %440 = vector.load %arg5[%c3_171, %c16_172, %c0_173] : memref<9x48x1xf32, #tpu.memory_space<vmem>>, vector<1x8x1xf32>
    %441 = vector.shape_cast %440 : vector<1x8x1xf32> to vector<8x1xf32>
    %442 = vector.broadcast %441 : vector<8x1xf32> to vector<8x256xf32>
    %443 = arith.mulf %256, %442 : vector<8x256xf32>
    %444 = arith.addf %439, %443 : vector<8x256xf32>
    %c4_174 = arith.constant 4 : index
    %c16_175 = arith.constant 16 : index
    %c0_176 = arith.constant 0 : index
    %445 = vector.load %arg5[%c4_174, %c16_175, %c0_176] : memref<9x48x1xf32, #tpu.memory_space<vmem>>, vector<1x8x1xf32>
    %446 = vector.shape_cast %445 : vector<1x8x1xf32> to vector<8x1xf32>
    %447 = vector.broadcast %446 : vector<8x1xf32> to vector<8x256xf32>
    %448 = arith.mulf %175, %447 : vector<8x256xf32>
    %449 = arith.addf %444, %448 : vector<8x256xf32>
    %c5_177 = arith.constant 5 : index
    %c16_178 = arith.constant 16 : index
    %c0_179 = arith.constant 0 : index
    %450 = vector.load %arg5[%c5_177, %c16_178, %c0_179] : memref<9x48x1xf32, #tpu.memory_space<vmem>>, vector<1x8x1xf32>
    %451 = vector.shape_cast %450 : vector<1x8x1xf32> to vector<8x1xf32>
    %452 = vector.broadcast %451 : vector<8x1xf32> to vector<8x256xf32>
    %453 = arith.mulf %282, %452 : vector<8x256xf32>
    %454 = arith.addf %449, %453 : vector<8x256xf32>
    %c6_180 = arith.constant 6 : index
    %c16_181 = arith.constant 16 : index
    %c0_182 = arith.constant 0 : index
    %455 = vector.load %arg5[%c6_180, %c16_181, %c0_182] : memref<9x48x1xf32, #tpu.memory_space<vmem>>, vector<1x8x1xf32>
    %456 = vector.shape_cast %455 : vector<1x8x1xf32> to vector<8x1xf32>
    %457 = vector.broadcast %456 : vector<8x1xf32> to vector<8x256xf32>
    %458 = arith.mulf %308, %457 : vector<8x256xf32>
    %459 = arith.addf %454, %458 : vector<8x256xf32>
    %c7_183 = arith.constant 7 : index
    %c16_184 = arith.constant 16 : index
    %c0_185 = arith.constant 0 : index
    %460 = vector.load %arg5[%c7_183, %c16_184, %c0_185] : memref<9x48x1xf32, #tpu.memory_space<vmem>>, vector<1x8x1xf32>
    %461 = vector.shape_cast %460 : vector<1x8x1xf32> to vector<8x1xf32>
    %462 = vector.broadcast %461 : vector<8x1xf32> to vector<8x256xf32>
    %463 = arith.mulf %311, %462 : vector<8x256xf32>
    %464 = arith.addf %459, %463 : vector<8x256xf32>
    %c8_186 = arith.constant 8 : index
    %c16_187 = arith.constant 16 : index
    %c0_188 = arith.constant 0 : index
    %465 = vector.load %arg5[%c8_186, %c16_187, %c0_188] : memref<9x48x1xf32, #tpu.memory_space<vmem>>, vector<1x8x1xf32>
    %466 = vector.shape_cast %465 : vector<1x8x1xf32> to vector<8x1xf32>
    %467 = vector.broadcast %466 : vector<8x1xf32> to vector<8x256xf32>
    %468 = arith.mulf %337, %467 : vector<8x256xf32>
    %469 = arith.addf %464, %468 : vector<8x256xf32>
    %c0_189 = arith.constant 0 : index
    %c24 = arith.constant 24 : index
    %c0_190 = arith.constant 0 : index
    %470 = vector.load %arg5[%c0_189, %c24, %c0_190] : memref<9x48x1xf32, #tpu.memory_space<vmem>>, vector<1x8x1xf32>
    %471 = vector.shape_cast %470 : vector<1x8x1xf32> to vector<8x1xf32>
    %472 = vector.broadcast %471 : vector<8x1xf32> to vector<8x256xf32>
    %473 = arith.mulf %201, %472 : vector<8x256xf32>
    %c1_191 = arith.constant 1 : index
    %c24_192 = arith.constant 24 : index
    %c0_193 = arith.constant 0 : index
    %474 = vector.load %arg5[%c1_191, %c24_192, %c0_193] : memref<9x48x1xf32, #tpu.memory_space<vmem>>, vector<1x8x1xf32>
    %475 = vector.shape_cast %474 : vector<1x8x1xf32> to vector<8x1xf32>
    %476 = vector.broadcast %475 : vector<8x1xf32> to vector<8x256xf32>
    %477 = arith.mulf %204, %476 : vector<8x256xf32>
    %478 = arith.addf %473, %477 : vector<8x256xf32>
    %c2_194 = arith.constant 2 : index
    %c24_195 = arith.constant 24 : index
    %c0_196 = arith.constant 0 : index
    %479 = vector.load %arg5[%c2_194, %c24_195, %c0_196] : memref<9x48x1xf32, #tpu.memory_space<vmem>>, vector<1x8x1xf32>
    %480 = vector.shape_cast %479 : vector<1x8x1xf32> to vector<8x1xf32>
    %481 = vector.broadcast %480 : vector<8x1xf32> to vector<8x256xf32>
    %482 = arith.mulf %230, %481 : vector<8x256xf32>
    %483 = arith.addf %478, %482 : vector<8x256xf32>
    %c3_197 = arith.constant 3 : index
    %c24_198 = arith.constant 24 : index
    %c0_199 = arith.constant 0 : index
    %484 = vector.load %arg5[%c3_197, %c24_198, %c0_199] : memref<9x48x1xf32, #tpu.memory_space<vmem>>, vector<1x8x1xf32>
    %485 = vector.shape_cast %484 : vector<1x8x1xf32> to vector<8x1xf32>
    %486 = vector.broadcast %485 : vector<8x1xf32> to vector<8x256xf32>
    %487 = arith.mulf %256, %486 : vector<8x256xf32>
    %488 = arith.addf %483, %487 : vector<8x256xf32>
    %c4_200 = arith.constant 4 : index
    %c24_201 = arith.constant 24 : index
    %c0_202 = arith.constant 0 : index
    %489 = vector.load %arg5[%c4_200, %c24_201, %c0_202] : memref<9x48x1xf32, #tpu.memory_space<vmem>>, vector<1x8x1xf32>
    %490 = vector.shape_cast %489 : vector<1x8x1xf32> to vector<8x1xf32>
    %491 = vector.broadcast %490 : vector<8x1xf32> to vector<8x256xf32>
    %492 = arith.mulf %175, %491 : vector<8x256xf32>
    %493 = arith.addf %488, %492 : vector<8x256xf32>
    %c5_203 = arith.constant 5 : index
    %c24_204 = arith.constant 24 : index
    %c0_205 = arith.constant 0 : index
    %494 = vector.load %arg5[%c5_203, %c24_204, %c0_205] : memref<9x48x1xf32, #tpu.memory_space<vmem>>, vector<1x8x1xf32>
    %495 = vector.shape_cast %494 : vector<1x8x1xf32> to vector<8x1xf32>
    %496 = vector.broadcast %495 : vector<8x1xf32> to vector<8x256xf32>
    %497 = arith.mulf %282, %496 : vector<8x256xf32>
    %498 = arith.addf %493, %497 : vector<8x256xf32>
    %c6_206 = arith.constant 6 : index
    %c24_207 = arith.constant 24 : index
    %c0_208 = arith.constant 0 : index
    %499 = vector.load %arg5[%c6_206, %c24_207, %c0_208] : memref<9x48x1xf32, #tpu.memory_space<vmem>>, vector<1x8x1xf32>
    %500 = vector.shape_cast %499 : vector<1x8x1xf32> to vector<8x1xf32>
    %501 = vector.broadcast %500 : vector<8x1xf32> to vector<8x256xf32>
    %502 = arith.mulf %308, %501 : vector<8x256xf32>
    %503 = arith.addf %498, %502 : vector<8x256xf32>
    %c7_209 = arith.constant 7 : index
    %c24_210 = arith.constant 24 : index
    %c0_211 = arith.constant 0 : index
    %504 = vector.load %arg5[%c7_209, %c24_210, %c0_211] : memref<9x48x1xf32, #tpu.memory_space<vmem>>, vector<1x8x1xf32>
    %505 = vector.shape_cast %504 : vector<1x8x1xf32> to vector<8x1xf32>
    %506 = vector.broadcast %505 : vector<8x1xf32> to vector<8x256xf32>
    %507 = arith.mulf %311, %506 : vector<8x256xf32>
    %508 = arith.addf %503, %507 : vector<8x256xf32>
    %c8_212 = arith.constant 8 : index
    %c24_213 = arith.constant 24 : index
    %c0_214 = arith.constant 0 : index
    %509 = vector.load %arg5[%c8_212, %c24_213, %c0_214] : memref<9x48x1xf32, #tpu.memory_space<vmem>>, vector<1x8x1xf32>
    %510 = vector.shape_cast %509 : vector<1x8x1xf32> to vector<8x1xf32>
    %511 = vector.broadcast %510 : vector<8x1xf32> to vector<8x256xf32>
    %512 = arith.mulf %337, %511 : vector<8x256xf32>
    %513 = arith.addf %508, %512 : vector<8x256xf32>
    %c0_215 = arith.constant 0 : index
    %c32 = arith.constant 32 : index
    %c0_216 = arith.constant 0 : index
    %514 = vector.load %arg5[%c0_215, %c32, %c0_216] : memref<9x48x1xf32, #tpu.memory_space<vmem>>, vector<1x8x1xf32>
    %515 = vector.shape_cast %514 : vector<1x8x1xf32> to vector<8x1xf32>
    %516 = vector.broadcast %515 : vector<8x1xf32> to vector<8x256xf32>
    %517 = arith.mulf %201, %516 : vector<8x256xf32>
    %c1_217 = arith.constant 1 : index
    %c32_218 = arith.constant 32 : index
    %c0_219 = arith.constant 0 : index
    %518 = vector.load %arg5[%c1_217, %c32_218, %c0_219] : memref<9x48x1xf32, #tpu.memory_space<vmem>>, vector<1x8x1xf32>
    %519 = vector.shape_cast %518 : vector<1x8x1xf32> to vector<8x1xf32>
    %520 = vector.broadcast %519 : vector<8x1xf32> to vector<8x256xf32>
    %521 = arith.mulf %204, %520 : vector<8x256xf32>
    %522 = arith.addf %517, %521 : vector<8x256xf32>
    %c2_220 = arith.constant 2 : index
    %c32_221 = arith.constant 32 : index
    %c0_222 = arith.constant 0 : index
    %523 = vector.load %arg5[%c2_220, %c32_221, %c0_222] : memref<9x48x1xf32, #tpu.memory_space<vmem>>, vector<1x8x1xf32>
    %524 = vector.shape_cast %523 : vector<1x8x1xf32> to vector<8x1xf32>
    %525 = vector.broadcast %524 : vector<8x1xf32> to vector<8x256xf32>
    %526 = arith.mulf %230, %525 : vector<8x256xf32>
    %527 = arith.addf %522, %526 : vector<8x256xf32>
    %c3_223 = arith.constant 3 : index
    %c32_224 = arith.constant 32 : index
    %c0_225 = arith.constant 0 : index
    %528 = vector.load %arg5[%c3_223, %c32_224, %c0_225] : memref<9x48x1xf32, #tpu.memory_space<vmem>>, vector<1x8x1xf32>
    %529 = vector.shape_cast %528 : vector<1x8x1xf32> to vector<8x1xf32>
    %530 = vector.broadcast %529 : vector<8x1xf32> to vector<8x256xf32>
    %531 = arith.mulf %256, %530 : vector<8x256xf32>
    %532 = arith.addf %527, %531 : vector<8x256xf32>
    %c4_226 = arith.constant 4 : index
    %c32_227 = arith.constant 32 : index
    %c0_228 = arith.constant 0 : index
    %533 = vector.load %arg5[%c4_226, %c32_227, %c0_228] : memref<9x48x1xf32, #tpu.memory_space<vmem>>, vector<1x8x1xf32>
    %534 = vector.shape_cast %533 : vector<1x8x1xf32> to vector<8x1xf32>
    %535 = vector.broadcast %534 : vector<8x1xf32> to vector<8x256xf32>
    %536 = arith.mulf %175, %535 : vector<8x256xf32>
    %537 = arith.addf %532, %536 : vector<8x256xf32>
    %c5_229 = arith.constant 5 : index
    %c32_230 = arith.constant 32 : index
    %c0_231 = arith.constant 0 : index
    %538 = vector.load %arg5[%c5_229, %c32_230, %c0_231] : memref<9x48x1xf32, #tpu.memory_space<vmem>>, vector<1x8x1xf32>
    %539 = vector.shape_cast %538 : vector<1x8x1xf32> to vector<8x1xf32>
    %540 = vector.broadcast %539 : vector<8x1xf32> to vector<8x256xf32>
    %541 = arith.mulf %282, %540 : vector<8x256xf32>
    %542 = arith.addf %537, %541 : vector<8x256xf32>
    %c6_232 = arith.constant 6 : index
    %c32_233 = arith.constant 32 : index
    %c0_234 = arith.constant 0 : index
    %543 = vector.load %arg5[%c6_232, %c32_233, %c0_234] : memref<9x48x1xf32, #tpu.memory_space<vmem>>, vector<1x8x1xf32>
    %544 = vector.shape_cast %543 : vector<1x8x1xf32> to vector<8x1xf32>
    %545 = vector.broadcast %544 : vector<8x1xf32> to vector<8x256xf32>
    %546 = arith.mulf %308, %545 : vector<8x256xf32>
    %547 = arith.addf %542, %546 : vector<8x256xf32>
    %c7_235 = arith.constant 7 : index
    %c32_236 = arith.constant 32 : index
    %c0_237 = arith.constant 0 : index
    %548 = vector.load %arg5[%c7_235, %c32_236, %c0_237] : memref<9x48x1xf32, #tpu.memory_space<vmem>>, vector<1x8x1xf32>
    %549 = vector.shape_cast %548 : vector<1x8x1xf32> to vector<8x1xf32>
    %550 = vector.broadcast %549 : vector<8x1xf32> to vector<8x256xf32>
    %551 = arith.mulf %311, %550 : vector<8x256xf32>
    %552 = arith.addf %547, %551 : vector<8x256xf32>
    %c8_238 = arith.constant 8 : index
    %c32_239 = arith.constant 32 : index
    %c0_240 = arith.constant 0 : index
    %553 = vector.load %arg5[%c8_238, %c32_239, %c0_240] : memref<9x48x1xf32, #tpu.memory_space<vmem>>, vector<1x8x1xf32>
    %554 = vector.shape_cast %553 : vector<1x8x1xf32> to vector<8x1xf32>
    %555 = vector.broadcast %554 : vector<8x1xf32> to vector<8x256xf32>
    %556 = arith.mulf %337, %555 : vector<8x256xf32>
    %557 = arith.addf %552, %556 : vector<8x256xf32>
    %c0_241 = arith.constant 0 : index
    %c40 = arith.constant 40 : index
    %c0_242 = arith.constant 0 : index
    %558 = vector.load %arg5[%c0_241, %c40, %c0_242] : memref<9x48x1xf32, #tpu.memory_space<vmem>>, vector<1x8x1xf32>
    %559 = vector.shape_cast %558 : vector<1x8x1xf32> to vector<8x1xf32>
    %560 = vector.broadcast %559 : vector<8x1xf32> to vector<8x256xf32>
    %561 = arith.mulf %201, %560 : vector<8x256xf32>
    %c1_243 = arith.constant 1 : index
    %c40_244 = arith.constant 40 : index
    %c0_245 = arith.constant 0 : index
    %562 = vector.load %arg5[%c1_243, %c40_244, %c0_245] : memref<9x48x1xf32, #tpu.memory_space<vmem>>, vector<1x8x1xf32>
    %563 = vector.shape_cast %562 : vector<1x8x1xf32> to vector<8x1xf32>
    %564 = vector.broadcast %563 : vector<8x1xf32> to vector<8x256xf32>
    %565 = arith.mulf %204, %564 : vector<8x256xf32>
    %566 = arith.addf %561, %565 : vector<8x256xf32>
    %c2_246 = arith.constant 2 : index
    %c40_247 = arith.constant 40 : index
    %c0_248 = arith.constant 0 : index
    %567 = vector.load %arg5[%c2_246, %c40_247, %c0_248] : memref<9x48x1xf32, #tpu.memory_space<vmem>>, vector<1x8x1xf32>
    %568 = vector.shape_cast %567 : vector<1x8x1xf32> to vector<8x1xf32>
    %569 = vector.broadcast %568 : vector<8x1xf32> to vector<8x256xf32>
    %570 = arith.mulf %230, %569 : vector<8x256xf32>
    %571 = arith.addf %566, %570 : vector<8x256xf32>
    %c3_249 = arith.constant 3 : index
    %c40_250 = arith.constant 40 : index
    %c0_251 = arith.constant 0 : index
    %572 = vector.load %arg5[%c3_249, %c40_250, %c0_251] : memref<9x48x1xf32, #tpu.memory_space<vmem>>, vector<1x8x1xf32>
    %573 = vector.shape_cast %572 : vector<1x8x1xf32> to vector<8x1xf32>
    %574 = vector.broadcast %573 : vector<8x1xf32> to vector<8x256xf32>
    %575 = arith.mulf %256, %574 : vector<8x256xf32>
    %576 = arith.addf %571, %575 : vector<8x256xf32>
    %c4_252 = arith.constant 4 : index
    %c40_253 = arith.constant 40 : index
    %c0_254 = arith.constant 0 : index
    %577 = vector.load %arg5[%c4_252, %c40_253, %c0_254] : memref<9x48x1xf32, #tpu.memory_space<vmem>>, vector<1x8x1xf32>
    %578 = vector.shape_cast %577 : vector<1x8x1xf32> to vector<8x1xf32>
    %579 = vector.broadcast %578 : vector<8x1xf32> to vector<8x256xf32>
    %580 = arith.mulf %175, %579 : vector<8x256xf32>
    %581 = arith.addf %576, %580 : vector<8x256xf32>
    %c5_255 = arith.constant 5 : index
    %c40_256 = arith.constant 40 : index
    %c0_257 = arith.constant 0 : index
    %582 = vector.load %arg5[%c5_255, %c40_256, %c0_257] : memref<9x48x1xf32, #tpu.memory_space<vmem>>, vector<1x8x1xf32>
    %583 = vector.shape_cast %582 : vector<1x8x1xf32> to vector<8x1xf32>
    %584 = vector.broadcast %583 : vector<8x1xf32> to vector<8x256xf32>
    %585 = arith.mulf %282, %584 : vector<8x256xf32>
    %586 = arith.addf %581, %585 : vector<8x256xf32>
    %c6_258 = arith.constant 6 : index
    %c40_259 = arith.constant 40 : index
    %c0_260 = arith.constant 0 : index
    %587 = vector.load %arg5[%c6_258, %c40_259, %c0_260] : memref<9x48x1xf32, #tpu.memory_space<vmem>>, vector<1x8x1xf32>
    %588 = vector.shape_cast %587 : vector<1x8x1xf32> to vector<8x1xf32>
    %589 = vector.broadcast %588 : vector<8x1xf32> to vector<8x256xf32>
    %590 = arith.mulf %308, %589 : vector<8x256xf32>
    %591 = arith.addf %586, %590 : vector<8x256xf32>
    %c7_261 = arith.constant 7 : index
    %c40_262 = arith.constant 40 : index
    %c0_263 = arith.constant 0 : index
    %592 = vector.load %arg5[%c7_261, %c40_262, %c0_263] : memref<9x48x1xf32, #tpu.memory_space<vmem>>, vector<1x8x1xf32>
    %593 = vector.shape_cast %592 : vector<1x8x1xf32> to vector<8x1xf32>
    %594 = vector.broadcast %593 : vector<8x1xf32> to vector<8x256xf32>
    %595 = arith.mulf %311, %594 : vector<8x256xf32>
    %596 = arith.addf %591, %595 : vector<8x256xf32>
    %c8_264 = arith.constant 8 : index
    %c40_265 = arith.constant 40 : index
    %c0_266 = arith.constant 0 : index
    %597 = vector.load %arg5[%c8_264, %c40_265, %c0_266] : memref<9x48x1xf32, #tpu.memory_space<vmem>>, vector<1x8x1xf32>
    %598 = vector.shape_cast %597 : vector<1x8x1xf32> to vector<8x1xf32>
    %599 = vector.broadcast %598 : vector<8x1xf32> to vector<8x256xf32>
    %600 = arith.mulf %337, %599 : vector<8x256xf32>
    %601 = arith.addf %596, %600 : vector<8x256xf32>
    %602 = tpu.concatenate %381, %425, %469, %513, %557, %601 in 0 : vector<8x256xf32>, vector<8x256xf32>, vector<8x256xf32>, vector<8x256xf32>, vector<8x256xf32>, vector<8x256xf32> -> vector<48x256xf32>
    %c0_267 = arith.constant 0 : index
    %c0_268 = arith.constant 0 : index
    %603 = vector.load %arg6[%c0_267, %c0_268] : memref<48x1xf32, #tpu.memory_space<vmem>>, vector<48x1xf32>
    %604 = vector.broadcast %603 : vector<48x1xf32> to vector<48x256xf32>
    %605 = arith.mulf %602, %604 : vector<48x256xf32>
    %c0_269 = arith.constant 0 : index
    %c0_270 = arith.constant 0 : index
    %606 = vector.load %arg7[%c0_269, %c0_270] : memref<48x1xf32, #tpu.memory_space<vmem>>, vector<48x1xf32>
    %607 = vector.broadcast %606 : vector<48x1xf32> to vector<48x256xf32>
    %608 = arith.addf %605, %607 : vector<48x256xf32>
    %c0_271 = arith.constant 0 : index
    %c0_272 = arith.constant 0 : index
    %609 = vector.load %arg8[%c0_271, %c0_272] : memref<8x48xbf16, #tpu.memory_space<vmem>>, vector<8x48xbf16>
    %610 = arith.truncf %608 : vector<48x256xf32> to vector<48x256xbf16>
    %cst_273 = arith.constant dense<0.000000e+00> : vector<8x256xf32>
    %611 = tpu.matmul %609, %610, %cst_273 {dimension_numbers = #tpu.dot_dimension_numbers<[1], [0], [0], [1], [0, 0, 1, 1], [], []>} : vector<8x48xbf16>, vector<48x256xbf16>, vector<8x256xf32> -> vector<8x256xf32>
    %c0_274 = arith.constant 0 : index
    %c0_275 = arith.constant 0 : index
    %612 = vector.load %arg9[%c0_274, %c0_275] : memref<8x1xf32, #tpu.memory_space<vmem>>, vector<8x1xf32>
    %613 = vector.broadcast %612 : vector<8x1xf32> to vector<8x256xf32>
    %614 = arith.mulf %611, %613 : vector<8x256xf32>
    %c0_276 = arith.constant 0 : index
    %c0_277 = arith.constant 0 : index
    %615 = vector.load %arg10[%c0_276, %c0_277] : memref<8x1xf32, #tpu.memory_space<vmem>>, vector<8x1xf32>
    %616 = vector.broadcast %615 : vector<8x1xf32> to vector<8x256xf32>
    %617 = arith.addf %614, %616 : vector<8x256xf32>
    %618 = arith.addf %617, %1 : vector<8x256xf32>
    %cst_278 = arith.constant 0.000000e+00 : f32
    %619 = vector.broadcast %cst_278 : f32 to vector<8x256xf32>
    %620 = arith.maximumf %618, %619 : vector<8x256xf32>
    %c0_279 = arith.constant 0 : index
    %c0_280 = arith.constant 0 : index
    %c0_281 = arith.constant 0 : index
    %621 = vector.load %arg11[%c0_279, %c0_280, %c0_281] : memref<1x8x256xf32, #tpu.memory_space<vmem>>, vector<1x8x256xf32>
    %622 = vector.shape_cast %621 : vector<1x8x256xf32> to vector<8x256xf32>
    %623 = vector.shape_cast %620 : vector<8x256xf32> to vector<1x8x256xf32>
    tpu.vector_store %arg11[%c0_279, %c0_280, %c0_281], %623 {strides = array<i32>} : memref<1x8x256xf32, #tpu.memory_space<vmem>>, vector<1x8x256xf32>,
    return
  }
  func.func @transform_0(%arg0: i32) -> (i32, i32, i32) {
    %c0_i32 = arith.constant 0 : i32
    %c0_i32_0 = arith.constant 0 : i32
    %c0_i32_1 = arith.constant 0 : i32
    return %arg0, %c0_i32, %c0_i32_0 : i32, i32, i32
  }
  func.func @transform_1(%arg0: i32) -> (i32, i32) {
    %c0_i32 = arith.constant 0 : i32
    %c0_i32_0 = arith.constant 0 : i32
    %c0_i32_1 = arith.constant 0 : i32
    return %c0_i32, %c0_i32_0 : i32, i32
  }
  func.func @transform_2(%arg0: i32) -> (i32, i32) {
    %c0_i32 = arith.constant 0 : i32
    %c0_i32_0 = arith.constant 0 : i32
    %c0_i32_1 = arith.constant 0 : i32
    return %c0_i32, %c0_i32_0 : i32, i32
  }
  func.func @transform_3(%arg0: i32) -> (i32, i32) {
    %c0_i32 = arith.constant 0 : i32
    %c0_i32_0 = arith.constant 0 : i32
    %c0_i32_1 = arith.constant 0 : i32
    return %c0_i32, %c0_i32_0 : i32, i32
  }
  func.func @transform_4(%arg0: i32) -> (i32, i32, i32) {
    %c0_i32 = arith.constant 0 : i32
    %c0_i32_0 = arith.constant 0 : i32
    %c0_i32_1 = arith.constant 0 : i32
    %c0_i32_2 = arith.constant 0 : i32
    return %c0_i32, %c0_i32_0, %c0_i32_1 : i32, i32, i32
  }
  func.func @transform_5(%arg0: i32) -> (i32, i32) {
    %c0_i32 = arith.constant 0 : i32
    %c0_i32_0 = arith.constant 0 : i32
    %c0_i32_1 = arith.constant 0 : i32
    return %c0_i32, %c0_i32_0 : i32, i32
  }
  func.func @transform_6(%arg0: i32) -> (i32, i32) {
    %c0_i32 = arith.constant 0 : i32
    %c0_i32_0 = arith.constant 0 : i32
    %c0_i32_1 = arith.constant 0 : i32
    return %c0_i32, %c0_i32_0 : i32, i32
  }
  func.func @transform_7(%arg0: i32) -> (i32, i32) {
    %c0_i32 = arith.constant 0 : i32
    %c0_i32_0 = arith.constant 0 : i32
    %c0_i32_1 = arith.constant 0 : i32
    return %c0_i32, %c0_i32_0 : i32, i32
  }
  func.func @transform_8(%arg0: i32) -> (i32, i32) {
    %c0_i32 = arith.constant 0 : i32
    %c0_i32_0 = arith.constant 0 : i32
    %c0_i32_1 = arith.constant 0 : i32
    return %c0_i32, %c0_i32_0 : i32, i32
  }
  func.func @transform_9(%arg0: i32) -> (i32, i32) {
    %c0_i32 = arith.constant 0 : i32
    %c0_i32_0 = arith.constant 0 : i32
    %c0_i32_1 = arith.constant 0 : i32
    return %c0_i32, %c0_i32_0 : i32, i32
  }
  func.func @transform_10(%arg0: i32) -> (i32, i32, i32) {
    %c0_i32 = arith.constant 0 : i32
    %c0_i32_0 = arith.constant 0 : i32
    %c0_i32_1 = arith.constant 0 : i32
    return %arg0, %c0_i32, %c0_i32_0 : i32, i32, i32
  }
}

</mosaic_0001>

<llo_original>
// kernel: tpu_custom_call.1
$region0: #{tpu_custom_call.1}
  #allocation0 [shape = 'u32[]', space=smem, size = 0x4, offset = 0x4, fixed_abs, tag = 'smem constant byte address 0x4 - core index']
  #allocation1 [shape = 'u32[144,128]{1,0:T(1,128)}', space=vmem, size = 0x12000, scoped, tag = 'internal scratch']
  %s0 = inlined_call_operand.vmem [shape: f32[2,8,256], index: 0, kind: input, shape index: {}]
  %s1 = inlined_call_operand.vmem [shape: bf16[8,72], index: 1, kind: input, shape index: {}]
  %s2 = inlined_call_operand.vmem [shape: f32[8,1], index: 2, kind: input, shape index: {}]
  %s3 = inlined_call_operand.vmem [shape: f32[8,1], index: 3, kind: input, shape index: {}]
  %s4 = inlined_call_operand.vmem [shape: f32[9,48,1], index: 4, kind: input, shape index: {}]
  %s5 = inlined_call_operand.vmem [shape: f32[48,1], index: 5, kind: input, shape index: {}]
  %s6 = inlined_call_operand.vmem [shape: f32[48,1], index: 6, kind: input, shape index: {}]
  %s7 = inlined_call_operand.vmem [shape: bf16[8,48], index: 7, kind: input, shape index: {}]
  %s8 = inlined_call_operand.vmem [shape: f32[8,1], index: 8, kind: input, shape index: {}]
  %s9 = inlined_call_operand.vmem [shape: f32[8,1], index: 9, kind: input, shape index: {}]
  %s10 = inlined_call_operand.hbm [shape: f32[2,8,256], index: 10, kind: output, shape index: {}]
  %s11 = sld [smem:[#allocation0]]
  $region73: #{tpu_custom_call.1} parent=0
    _
  %s13 = ssub.s32 1, %s11
  %s14 = scalar_select 0, %s13, %s11
  $region1: #{tpu_custom_call.1} parent=0
    #allocation2 [shape = 'u8[16384]{0}', space=vmem, size = 0x4000, scoped, tag = 'output window, operand 0']
    #allocation3 [shape = 's32[2]{0}', space=sflag, size = 0x8, scoped, tag = 'scoped memory for tpu_custom_call.1']
    %15 = vsyncpa [#allocation3], 0
    %s16 = scalar_lea.sflag [#allocation3], 1
    %17 = vsyncpa %s16, 0
    loop: start=0, step=1, limit=4
    $region2: #{tpu_custom_call.1} parent=1 // loop_pre_header
      _
    $region3: #{tpu_custom_call.1} parent=1 // loop_header
      %s19 = sphi 0, %s23
      %p20 = scmp.ge.s32.totalorder %s19, 4
      %s29 = sphi 0, %s31
      %s32 = sphi 0, %s29
      %s33 = sphi 0, %s32
      %s49 = sphi 0, %s33
      %s53 = sphi 0, %s53
      %s55 = sphi 0, %s53
      %s56 = sphi 0, %s55
      %s70 = sphi 0, %s56
      %s74 = sphi 0, %s74
      %s76 = sphi 0, %s74
      %s77 = sphi 0, %s76
      %s91 = sphi 0, %s77
      %s95 = sphi 0, %s95
      %s97 = sphi 0, %s95
      %s98 = sphi 0, %s97
      %s112 = sphi 0, %s98
      %s116 = sphi 0, %s116
      %s118 = sphi 0, %s116
      %s119 = sphi 0, %s118
      %s133 = sphi 0, %s119
      %s137 = sphi 0, %s137
      %s139 = sphi 0, %s137
      %s140 = sphi 0, %s139
      %s154 = sphi 0, %s140
      %s158 = sphi 0, %s158
      %s160 = sphi 0, %s158
      %s161 = sphi 0, %s160
      %s175 = sphi 0, %s161
      %s179 = sphi 0, %s179
      %s181 = sphi 0, %s179
      %s182 = sphi 0, %s181
      %s196 = sphi 0, %s182
      %s200 = sphi 0, %s200
      %s202 = sphi 0, %s200
      %s203 = sphi 0, %s202
      %s217 = sphi 0, %s203
      %s221 = sphi 0, %s221
      %s223 = sphi 0, %s221
      %s224 = sphi 0, %s223
      %s238 = sphi 0, %s224
      %s244 = sphi 0, %s246
      %s247 = sphi 0, %s244
      %s248 = sphi 0, %s247
      %s264 = sphi 0, %s248
    $region4: #{tpu_custom_call.1} parent=1 // loop_header_branch
      %22 = sbr.rel (%p20) target = $region8
    $region5: #{tpu_custom_call.1} parent=1 // loop_body
      %s24 = ssub.s32 %s19, 1
      %s25 = ssub.s32 %s19, 2
      %s26 = sadd.s32 %s19, 1
      %s27 = ssub.s32 %s19, %s26
      %p28 = scmp.eq.s32.totalorder %s27, 0
      %s30 = sadd.s32 %s29, 1
      %s31 = scalar_select %p28, %s29, %s30
      %p34 = pneg %p28
      %p35 = scmp.eq.s32.totalorder %s19, 1
      %p36 = por %p34, %p35
      %p37 = scmp.ne.s32.totalorder %s29, %s32
      %p38 = scmp.eq.s32.totalorder %s19, 0
      %p39 = por %p37, %p38
      %p40 = scmp.ne.s32.totalorder %s29, %s32
      %p41 = scmp.eq.s32.totalorder %s24, 1
      %p42 = por %p40, %p41
      %p43 = scmp.ne.s32.totalorder %s32, %s33
      %p44 = scmp.eq.s32.totalorder %s24, 0
      %p45 = por %p43, %p44
      %p46 = scmp.ne.s32.totalorder %s32, %s33
      %p47 = scmp.eq.s32.totalorder %s25, 1
      %p48 = por %p46, %p47
      %p50 = scmp.ne.s32.totalorder %s33, %s49
      %p51 = scmp.eq.s32.totalorder %s25, 0
      %p52 = por %p50, %p51
      %s54 = sadd.s32 %s53, 1
      %p57 = scmp.eq.s32.totalorder %s19, 1
      %p58 = scmp.ne.s32.totalorder %s53, %s55
      %p59 = scmp.eq.s32.totalorder %s19, 0
      %p60 = por %p58, %p59
      %p61 = scmp.ne.s32.totalorder %s53, %s55
      %p62 = scmp.eq.s32.totalorder %s24, 1
      %p63 = por %p61, %p62
      %p64 = scmp.ne.s32.totalorder %s55, %s56
      %p65 = scmp.eq.s32.totalorder %s24, 0
      %p66 = por %p64, %p65
      %p67 = scmp.ne.s32.totalorder %s55, %s56
      %p68 = scmp.eq.s32.totalorder %s25, 1
      %p69 = por %p67, %p68
      %p71 = scmp.ne.s32.totalorder %s56, %s70
      %p72 = scmp.eq.s32.totalorder %s25, 0
      %p73 = por %p71, %p72
      %s75 = sadd.s32 %s74, 1
      %p78 = scmp.eq.s32.totalorder %s19, 1
      %p79 = scmp.ne.s32.totalorder %s74, %s76
      %p80 = scmp.eq.s32.totalorder %s19, 0
      %p81 = por %p79, %p80
      %p82 = scmp.ne.s32.totalorder %s74, %s76
      %p83 = scmp.eq.s32.totalorder %s24, 1
      %p84 = por %p82, %p83
      %p85 = scmp.ne.s32.totalorder %s76, %s77
      %p86 = scmp.eq.s32.totalorder %s24, 0
      %p87 = por %p85, %p86
      %p88 = scmp.ne.s32.totalorder %s76, %s77
      %p89 = scmp.eq.s32.totalorder %s25, 1
      %p90 = por %p88, %p89
      %p92 = scmp.ne.s32.totalorder %s77, %s91
      %p93 = scmp.eq.s32.totalorder %s25, 0
      %p94 = por %p92, %p93
      %s96 = sadd.s32 %s95, 1
      %p99 = scmp.eq.s32.totalorder %s19, 1
      %p100 = scmp.ne.s32.totalorder %s95, %s97
      %p101 = scmp.eq.s32.totalorder %s19, 0
      %p102 = por %p100, %p101
      %p103 = scmp.ne.s32.totalorder %s95, %s97
      %p104 = scmp.eq.s32.totalorder %s24, 1
      %p105 = por %p103, %p104
      %p106 = scmp.ne.s32.totalorder %s97, %s98
      %p107 = scmp.eq.s32.totalorder %s24, 0
      %p108 = por %p106, %p107
      %p109 = scmp.ne.s32.totalorder %s97, %s98
      %p110 = scmp.eq.s32.totalorder %s25, 1
      %p111 = por %p109, %p110
      %p113 = scmp.ne.s32.totalorder %s98, %s112
      %p114 = scmp.eq.s32.totalorder %s25, 0
      %p115 = por %p113, %p114
      %s117 = sadd.s32 %s116, 1
      %p120 = scmp.eq.s32.totalorder %s19, 1
      %p121 = scmp.ne.s32.totalorder %s116, %s118
      %p122 = scmp.eq.s32.totalorder %s19, 0
      %p123 = por %p121, %p122
      %p124 = scmp.ne.s32.totalorder %s116, %s118
      %p125 = scmp.eq.s32.totalorder %s24, 1
      %p126 = por %p124, %p125
      %p127 = scmp.ne.s32.totalorder %s118, %s119
      %p128 = scmp.eq.s32.totalorder %s24, 0
      %p129 = por %p127, %p128
      %p130 = scmp.ne.s32.totalorder %s118, %s119
      %p131 = scmp.eq.s32.totalorder %s25, 1
      %p132 = por %p130, %p131
      %p134 = scmp.ne.s32.totalorder %s119, %s133
      %p135 = scmp.eq.s32.totalorder %s25, 0
      %p136 = por %p134, %p135
      %s138 = sadd.s32 %s137, 1
      %p141 = scmp.eq.s32.totalorder %s19, 1
      %p142 = scmp.ne.s32.totalorder %s137, %s139
      %p143 = scmp.eq.s32.totalorder %s19, 0
      %p144 = por %p142, %p143
      %p145 = scmp.ne.s32.totalorder %s137, %s139
      %p146 = scmp.eq.s32.totalorder %s24, 1
      %p147 = por %p145, %p146
      %p148 = scmp.ne.s32.totalorder %s139, %s140
      %p149 = scmp.eq.s32.totalorder %s24, 0
      %p150 = por %p148, %p149
      %p151 = scmp.ne.s32.totalorder %s139, %s140
      %p152 = scmp.eq.s32.totalorder %s25, 1
      %p153 = por %p151, %p152
      %p155 = scmp.ne.s32.totalorder %s140, %s154
      %p156 = scmp.eq.s32.totalorder %s25, 0
      %p157 = por %p155, %p156
      %s159 = sadd.s32 %s158, 1
      %p162 = scmp.eq.s32.totalorder %s19, 1
      %p163 = scmp.ne.s32.totalorder %s158, %s160
      %p164 = scmp.eq.s32.totalorder %s19, 0
      %p165 = por %p163, %p164
      %p166 = scmp.ne.s32.totalorder %s158, %s160
      %p167 = scmp.eq.s32.totalorder %s24, 1
      %p168 = por %p166, %p167
      %p169 = scmp.ne.s32.totalorder %s160, %s161
      %p170 = scmp.eq.s32.totalorder %s24, 0
      %p171 = por %p169, %p170
      %p172 = scmp.ne.s32.totalorder %s160, %s161
      %p173 = scmp.eq.s32.totalorder %s25, 1
      %p174 = por %p172, %p173
      %p176 = scmp.ne.s32.totalorder %s161, %s175
      %p177 = scmp.eq.s32.totalorder %s25, 0
      %p178 = por %p176, %p177
      %s180 = sadd.s32 %s179, 1
      %p183 = scmp.eq.s32.totalorder %s19, 1
      %p184 = scmp.ne.s32.totalorder %s179, %s181
      %p185 = scmp.eq.s32.totalorder %s19, 0
      %p186 = por %p184, %p185
      %p187 = scmp.ne.s32.totalorder %s179, %s181
      %p188 = scmp.eq.s32.totalorder %s24, 1
      %p189 = por %p187, %p188
      %p190 = scmp.ne.s32.totalorder %s181, %s182
      %p191 = scmp.eq.s32.totalorder %s24, 0
      %p192 = por %p190, %p191
      %p193 = scmp.ne.s32.totalorder %s181, %s182
      %p194 = scmp.eq.s32.totalorder %s25, 1
      %p195 = por %p193, %p194
      %p197 = scmp.ne.s32.totalorder %s182, %s196
      %p198 = scmp.eq.s32.totalorder %s25, 0
      %p199 = por %p197, %p198
      %s201 = sadd.s32 %s200, 1
      %p204 = scmp.eq.s32.totalorder %s19, 1
      %p205 = scmp.ne.s32.totalorder %s200, %s202
      %p206 = scmp.eq.s32.totalorder %s19, 0
      %p207 = por %p205, %p206
      %p208 = scmp.ne.s32.totalorder %s200, %s202
      %p209 = scmp.eq.s32.totalorder %s24, 1
      %p210 = por %p208, %p209
      %p211 = scmp.ne.s32.totalorder %s202, %s203
      %p212 = scmp.eq.s32.totalorder %s24, 0
      %p213 = por %p211, %p212
      %p214 = scmp.ne.s32.totalorder %s202, %s203
      %p215 = scmp.eq.s32.totalorder %s25, 1
      %p216 = por %p214, %p215
      %p218 = scmp.ne.s32.totalorder %s203, %s217
      %p219 = scmp.eq.s32.totalorder %s25, 0
      %p220 = por %p218, %p219
      %s222 = sadd.s32 %s221, 1
      %p225 = scmp.eq.s32.totalorder %s19, 1
      %p226 = scmp.ne.s32.totalorder %s221, %s223
      %p227 = scmp.eq.s32.totalorder %s19, 0
      %p228 = por %p226, %p227
      %p229 = scmp.ne.s32.totalorder %s221, %s223
      %p230 = scmp.eq.s32.totalorder %s24, 1
      %p231 = por %p229, %p230
      %p232 = scmp.ne.s32.totalorder %s223, %s224
      %p233 = scmp.eq.s32.totalorder %s24, 0
      %p234 = por %p232, %p233
      %p235 = scmp.ne.s32.totalorder %s223, %s224
      %p236 = scmp.eq.s32.totalorder %s25, 1
      %p237 = por %p235, %p236
      %p239 = scmp.ne.s32.totalorder %s224, %s238
      %p240 = scmp.eq.s32.totalorder %s25, 0
      %p241 = por %p239, %p240
      %s242 = ssub.s32 %s19, %s26
      %p243 = scmp.eq.s32.totalorder %s242, 0
      %s245 = sadd.s32 %s244, 1
      %s246 = scalar_select %p243, %s244, %s245
      %p249 = pneg %p243
      %p250 = scmp.eq.s32.totalorder %s19, 1
      %p251 = por %p249, %p250
      %p252 = scmp.ne.s32.totalorder %s244, %s247
      %p253 = scmp.eq.s32.totalorder %s19, 0
      %p254 = por %p252, %p253
      %p255 = scmp.ne.s32.totalorder %s244, %s247
      %p256 = scmp.eq.s32.totalorder %s24, 1
      %p257 = por %p255, %p256
      %p258 = scmp.ne.s32.totalorder %s247, %s248
      %p259 = scmp.eq.s32.totalorder %s24, 0
      %p260 = por %p258, %p259
      %p261 = scmp.ne.s32.totalorder %s247, %s248
      %p262 = scmp.eq.s32.totalorder %s25, 1
      %p263 = por %p261, %p262
      %p265 = scmp.ne.s32.totalorder %s248, %s264
      %p266 = scmp.eq.s32.totalorder %s25, 0
      %p267 = por %p265, %p266
      %p268 = scmp.le.s32.totalorder 1, %s19
      %p269 = scmp.lt.s32.totalorder %s19, 3
      %p270 = pnand %p268, %p269
      %p271 = pneg %p270
      // Predicated region
      $region9: #{tpu_custom_call.1} parent=5 // pred_check
        _
      $region10: #{tpu_custom_call.1} parent=5 // pred_check_branch
        %273 = sbr.rel (%p270) target = $region12
      $region11: #{tpu_custom_call.1} parent=5 // pred_region
        %s274 = ssub.s32 %s19, 1
        // Predicated region
        $region13: #{tpu_custom_call.1} parent=11 // pred_check
          %p275 = pneg %p66
        $region14: #{tpu_custom_call.1} parent=11 // pred_check_branch
          %277 = sbr.rel (%p275) target = $region16
        $region15: #{tpu_custom_call.1} parent=11 // pred_region
          _
        $region16: #{tpu_custom_call.1} parent=11 // pred_fallthru
          _
        // Predicated region
        $region17: #{tpu_custom_call.1} parent=11 // pred_check
          %p278 = pneg %p87
        $region18: #{tpu_custom_call.1} parent=11 // pred_check_branch
          %280 = sbr.rel (%p278) target = $region20
        $region19: #{tpu_custom_call.1} parent=11 // pred_region
          _
        $region20: #{tpu_custom_call.1} parent=11 // pred_fallthru
          _
        // Predicated region
        $region21: #{tpu_custom_call.1} parent=11 // pred_check
          %p281 = pneg %p108
        $region22: #{tpu_custom_call.1} parent=11 // pred_check_branch
          %283 = sbr.rel (%p281) target = $region24
        $region23: #{tpu_custom_call.1} parent=11 // pred_region
          _
        $region24: #{tpu_custom_call.1} parent=11 // pred_fallthru
          _
        // Predicated region
        $region25: #{tpu_custom_call.1} parent=11 // pred_check
          %p284 = pneg %p129
        $region26: #{tpu_custom_call.1} parent=11 // pred_check_branch
          %286 = sbr.rel (%p284) target = $region28
        $region27: #{tpu_custom_call.1} parent=11 // pred_region
          _
        $region28: #{tpu_custom_call.1} parent=11 // pred_fallthru
          _
        // Predicated region
        $region29: #{tpu_custom_call.1} parent=11 // pred_check
          %p287 = pneg %p150
        $region30: #{tpu_custom_call.1} parent=11 // pred_check_branch
          %289 = sbr.rel (%p287) target = $region32
        $region31: #{tpu_custom_call.1} parent=11 // pred_region
          _
        $region32: #{tpu_custom_call.1} parent=11 // pred_fallthru
          _
        // Predicated region
        $region33: #{tpu_custom_call.1} parent=11 // pred_check
          %p290 = pneg %p171
        $region34: #{tpu_custom_call.1} parent=11 // pred_check_branch
          %292 = sbr.rel (%p290) target = $region36
        $region35: #{tpu_custom_call.1} parent=11 // pred_region
          _
        $region36: #{tpu_custom_call.1} parent=11 // pred_fallthru
          _
        // Predicated region
        $region37: #{tpu_custom_call.1} parent=11 // pred_check
          %p293 = pneg %p192
        $region38: #{tpu_custom_call.1} parent=11 // pred_check_branch
          %295 = sbr.rel (%p293) target = $region40
        $region39: #{tpu_custom_call.1} parent=11 // pred_region
          _
        $region40: #{tpu_custom_call.1} parent=11 // pred_fallthru
          _
        // Predicated region
        $region41: #{tpu_custom_call.1} parent=11 // pred_check
          %p296 = pneg %p213
        $region42: #{tpu_custom_call.1} parent=11 // pred_check_branch
          %298 = sbr.rel (%p296) target = $region44
        $region43: #{tpu_custom_call.1} parent=11 // pred_region
          _
        $region44: #{tpu_custom_call.1} parent=11 // pred_fallthru
          _
        // Predicated region
        $region45: #{tpu_custom_call.1} parent=11 // pred_check
          %p299 = pneg %p234
        $region46: #{tpu_custom_call.1} parent=11 // pred_check_branch
          %301 = sbr.rel (%p299) target = $region48
        $region47: #{tpu_custom_call.1} parent=11 // pred_region
          _
        $region48: #{tpu_custom_call.1} parent=11 // pred_fallthru
          _
      $region12: #{tpu_custom_call.1} parent=5 // pred_fallthru
        _
      %p302 = scmp.lt.s32.totalorder %s19, 2
      // Predicated region
      $region49: #{tpu_custom_call.1} parent=5 // pred_check
        %p303 = pneg %p302
      $region50: #{tpu_custom_call.1} parent=5 // pred_check_branch
        %305 = sbr.rel (%p303) target = $region52
      $region51: #{tpu_custom_call.1} parent=5 // pred_region
        // Predicated region
        $region53: #{tpu_custom_call.1} parent=51 // pred_check
          %p306 = pneg %p39
        $region54: #{tpu_custom_call.1} parent=51 // pred_check_branch
          %308 = sbr.rel (%p306) target = $region56
        $region55: #{tpu_custom_call.1} parent=51 // pred_region
          %p309 = scmp.lt.s32.totalorder %s19, 1
          %s310 = scalar_select %p309, %s19, 1
          %s311 = smul.addr %s310, 2
          %s312 = smul.addr %s311, 8
          %s313 = scalar_lea.vmem %s0, %s312
        $region56: #{tpu_custom_call.1} parent=51 // pred_fallthru
          _
      $region52: #{tpu_custom_call.1} parent=5 // pred_fallthru
        _
      %p314 = scmp.le.s32.totalorder 1, %s19
      %p315 = scmp.lt.s32.totalorder %s19, 3
      %p316 = pnand %p314, %p315
      %p317 = pneg %p316
      // Predicated region
      $region57: #{tpu_custom_call.1} parent=5 // pred_check
        _
      $region58: #{tpu_custom_call.1} parent=5 // pred_check_branch
        %319 = sbr.rel (%p316) target = $region60
      $region59: #{tpu_custom_call.1} parent=5 // pred_region
        %s320 = ssub.s32 %s19, 1
        %p321 = scmp.lt.s32.totalorder %s24, 1
        %s322 = scalar_select %p321, %s24, 1
        %s323 = smul.addr %s322, 2
        %s324 = smul.addr %s323, 8
        %s325 = scalar_lea.vmem %s0, %s324
        %p326 = pneg %p45
        %p327 = pneg %p42
        %p328 = pneg %p66
        %p329 = pneg %p63
        %p330 = pneg %p87
        %p331 = pneg %p84
        %p332 = pneg %p108
        %p333 = pneg %p105
        %p334 = pneg %p129
        %p335 = pneg %p126
        %p336 = pneg %p150
        %p337 = pneg %p147
        %p338 = pneg %p171
        %p339 = pneg %p168
        %p340 = pneg %p192
        %p341 = pneg %p189
        %p342 = pneg %p213
        %p343 = pneg %p210
        %p344 = pneg %p234
        %p345 = pneg %p231
        %p346 = pneg %p260
        %p347 = pneg %p257
        %s348 = sand.u32 %s247, 1
        %s349 = scalar_lea.sflag [#allocation3], %s348
        %s350 = sand.u32 %s247, 1
        %s351 = smul.addr %s350, 16
        %s352 = scalar_lea.vmem [#allocation2], %s351
        %p353 = scmp.lt.s32.totalorder %s24, 1
        %s354 = scalar_select %p353, %s24, 1
        %s355 = smul.addr %s354, 2
        %s356 = smul.addr %s355, 8
        %s357 = scalar_lea.vmem %s0, %s356
        %v359 = vld [vmem:[%s357] sm:$0xff]
        %v360 = vld [vmem:[%s357 + $0x8] sm:$0xff]
        %363 = vrot.lane.b32.xlu0 %v359, 17
        %v364 = vpop.permute.xlu0 %363
        %365 = vrot.lane.b32.xlu0 %v360, 17
        %v366 = vpop.permute.xlu0 %365
        %vm367 = vcmask 138240
        %v368 = vsel %vm367, %v364, %v366
        %v371 = vsel %vm367, 0.0, %v364
        %v372 = vlaneseq
        %v373 = vand.u32 %v372, 127
        %v374 = vadd.s32 %v373, 128
        %vm375 = vcmp.lt.s32.totalorder %v373, 0
        %v376 = vsub.s32 0, %v373
        %v377 = vsel %vm375, %v376, %v373
        %v378 = vshrl.u32 %v377, 4
        %v379 = vand.u32 %v377, 15
        %v380 = vsub.s32 0, %v379
        %v381 = vsel %vm375, %v380, %v379
        %vm382 = vcmp.lt.s32.totalorder %v374, 0
        %v383 = vsub.s32 0, %v374
        %v384 = vsel %vm382, %v383, %v374
        %v385 = vshrl.u32 %v384, 4
        %v386 = vand.u32 %v384, 15
        %v387 = vsub.s32 0, %v386
        %v388 = vsel %vm382, %v387, %v386
        %vm389 = vcmp.ne.s32.totalorder %v381, 0
        %vm390 = vcmp.ne.s32.totalorder %v388, 0
        %vm391 = vcmp.lt.s32.totalorder %v381, 0
        %vm392 = vcmp.lt.s32.totalorder %v388, 0
        %vm393 = vmand %vm391, %vm389
        %vm394 = vmand %vm392, %vm390
        %v395 = vadd.s32 %v381, 16
        %v396 = vadd.s32 %v388, 16
        %v397 = vsel %vm393, %v395, %v381
        %v398 = vsel %vm394, %v396, %v388
        %vm399 = vcmp.ge.s32.totalorder %v397, 1
        %vm400 = vcmp.ge.s32.totalorder %v398, 1
        %v401 = vsel %vm399, 1, 0
        %v402 = vsel %vm400, 1, 0
        %vm403 = vcmp.eq.s32.totalorder %v401, 1
        %vm404 = vcmp.eq.s32.totalorder %v402, 1
        %v405 = vsel %vm403, %v371, 0.0
        %v406 = vsel %vm404, %v368, 0.0
        %407 = vrot.lane.b32.xlu0 %v359, 16
        %v408 = vpop.permute.xlu0 %407
        %409 = vrot.lane.b32.xlu0 %v360, 16
        %v410 = vpop.permute.xlu0 %409
        %vm411 = vcmask 130048
        %v412 = vsel %vm411, %v408, %v410
        %v415 = vsel %vm411, 0.0, %v408
        %416 = vrot.lane.b32.xlu0 %v359, 15
        %v417 = vpop.permute.xlu0 %416
        %418 = vrot.lane.b32.xlu0 %v360, 15
        %v419 = vpop.permute.xlu0 %418
        %vm420 = vcmask 121856
        %v421 = vsel %vm420, %v417, %v419
        %v424 = vsel %vm420, 0.0, %v417
        %vm425 = vcmp.lt.s32.totalorder %v397, 15
        %vm426 = vcmp.lt.s32.totalorder %v398, 15
        %v427 = vsel %vm425, 1, 0
        %v428 = vsel %vm426, 1, 0
        %vm429 = vcmp.eq.s32.totalorder %v427, 1
        %vm430 = vcmp.eq.s32.totalorder %v428, 1
        %v431 = vsel %vm429, %v424, 0.0
        %v432 = vsel %vm430, %v421, 0.0
        %433 = vrot.lane.b32.xlu0 %v359, 1
        %v434 = vpop.permute.xlu0 %433
        %435 = vrot.lane.b32.xlu0 %v360, 1
        %v436 = vpop.permute.xlu0 %435
        %vm437 = vcmask 7168
        %v438 = vsel %vm437, %v434, %v436
        %v441 = vsel %vm437, 0.0, %v434
        %v442 = vsel %vm403, %v441, 0.0
        %v443 = vsel %vm404, %v438, 0.0
        %444 = vrot.lane.b32.xlu0 %v359, 127
        %v445 = vpop.permute.xlu0 %444
        %446 = vrot.lane.b32.xlu0 %v360, 127
        %v447 = vpop.permute.xlu0 %446
        %vm448 = vcmask 1039360
        %v449 = vsel %vm448, %v445, %v447
        %v452 = vsel %vm448, %v447, 0.0
        %v453 = vsel %vm429, %v449, 0.0
        %v454 = vsel %vm430, %v452, 0.0
        %455 = vrot.lane.b32.xlu0 %v359, 113
        %v456 = vpop.permute.xlu0 %455
        %457 = vrot.lane.b32.xlu0 %v360, 113
        %v458 = vpop.permute.xlu0 %457
        %vm459 = vcmask 924672
        %v460 = vsel %vm459, %v456, %v458
        %v463 = vsel %vm459, %v458, 0.0
        %v464 = vsel %vm403, %v460, 0.0
        %v465 = vsel %vm404, %v463, 0.0
        %466 = vrot.lane.b32.xlu0 %v359, 112
        %v467 = vpop.permute.xlu0 %466
        %468 = vrot.lane.b32.xlu0 %v360, 112
        %v469 = vpop.permute.xlu0 %468
        %vm470 = vcmask 916480
        %v471 = vsel %vm470, %v467, %v469
        %v474 = vsel %vm470, %v469, 0.0
        %475 = vrot.lane.b32.xlu0 %v359, 111
        %v476 = vpop.permute.xlu0 %475
        %477 = vrot.lane.b32.xlu0 %v360, 111
        %v478 = vpop.permute.xlu0 %477
        %vm479 = vcmask 908288
        %v480 = vsel %vm479, %v476, %v478
        %v483 = vsel %vm479, %v478, 0.0
        %v484 = vsel %vm429, %v480, 0.0
        %v485 = vsel %vm430, %v483, 0.0
        %v486 = vpack.c.bf16 %v415, %v405
        %v487 = vpack.c.bf16 %v412, %v406
        %v488 = vpack.c.bf16 %v442, %v431
        %v489 = vpack.c.bf16 %v443, %v432
        %v490 = vpack.c.bf16 %v453, %v359
        %v491 = vpack.c.bf16 %v454, %v360
        %v492 = vpack.c.bf16 %v471, %v464
        %v493 = vpack.c.bf16 %v474, %v465
        %v494 = vpack.c.bf16 %v484, %v484
        %v495 = vpack.c.bf16 %v485, %v485
        %v496 = vld [vmem:[%s1] sm:$0xf]
        %vm497 = vcmask 588800
        %v499 = vsel %vm497, %v496, 0
        %vm501 = vcmask 1043456
        %v503 = vsel %vm501, %v494, 0
        %v506 = vsel %vm501, %v495, 0
        %508 = vmatprep.subr.bf16.mxu0 %v487
        %509 = vmatpush1.bf16.msra.mxu0 %v486
        %510 = vmatprep.subr.bf16.mxu0 %v489
        %511 = vmatpush1.bf16.msra.mxu0 %v488
        %512 = vmatprep.subr.bf16.mxu0 %v491
        %513 = vmatpush1.bf16.msra.mxu0 %v490
        %514 = vmatprep.subr.bf16.mxu0 %v493
        %515 = vmatpush1.bf16.msra.mxu0 %v492
        %516 = vmatprep.subr.bf16.mxu0 %v506
        %517 = vmatpush1.bf16.msra.mxu0 %v503
        %518 = vmatprep.subr.bf16.mxu0 0
        %519 = vmatpush1.bf16.msra.mxu0 0
        %520 = vmatprep.subr.bf16.mxu0 0
        %521 = vmatpush1.bf16.msra.mxu0 0
        %522 = vmatprep.subr.bf16.mxu0 0
        %523 = vmatpush1.bf16.msra.mxu0 0
        %524 = vmatprep.subr.bf16.mxu0 0
        %525 = vmatpush1.bf16.msra.mxu0 0
        %526 = vmatprep.subr.bf16.mxu0 0
        %527 = vmatpush1.bf16.msra.mxu0 0
        %528 = vmatprep.subr.bf16.mxu0 0
        %529 = vmatpush1.bf16.msra.mxu0 0
        %530 = vmatprep.subr.bf16.mxu0 0
        %531 = vmatpush1.bf16.msra.mxu0 0
        %532 = vmatprep.subr.bf16.mxu0 0
        %533 = vmatpush1.bf16.msra.mxu0 0
        %534 = vmatprep.subr.bf16.mxu0 0
        %535 = vmatpush1.bf16.msra.mxu0 0
        %536 = vmatprep.subr.bf16.mxu0 0
        %537 = vmatpush1.bf16.msra.mxu0 0
        %538 = vmatprep.subr.bf16.mxu0 0
        %539 = vmatpush1.bf16.msra.mxu0 0
        %540 = vmatprep.mubr.bf16.mxu0 0
        %541 = vmatmul.mubr.bf16.gmra.mrb[0].mxu0 %v499
        %v542 = vpop.f32.mrb[0].mxu0
        %v543 = vadd.f32 0.0, %v542
        %v544 = vpop.f32.mrb[0].mxu0
        %v545 = vadd.f32 0.0, %v544
        %v546 = vpop.f32.mrb[0].mxu0
        %v547 = vpop.f32.mrb[0].mxu0
        %548 = vdwg.mxu0
        %v549 = vld [vmem:[%s2] sm:$0xff]
        %551 = vset.pattern.permute.xlu0 0
        %552 = vperm.xlu0 %551, %v549
        %v553 = vpop.permute.xlu0 %552
        %v555 = vmul.f32 %v543, %v553
        %v556 = vmul.f32 %v545, %v553
        %v557 = vld [vmem:[%s3] sm:$0xff]
        %559 = vset.pattern.permute.xlu0 0
        %560 = vperm.xlu0 %559, %v557
        %v561 = vpop.permute.xlu0 %560
        %v563 = vadd.f32 %v555, %v561
        %v564 = vadd.f32 %v556, %v561
        %v565 = vmax.f32 %v563, 0.0
        %v566 = vmax.f32 %v564, 0.0
        %569 = vrot.lane.b32.xlu0 %v565, 17
        %v570 = vpop.permute.xlu0 %569
        %571 = vrot.lane.b32.xlu0 %v566, 17
        %v572 = vpop.permute.xlu0 %571
        %v573 = vsel %vm367, %v570, %v572
        %v576 = vsel %vm367, 0.0, %v570
        %v577 = vsel %vm403, %v576, 0.0
        %v578 = vsel %vm404, %v573, 0.0
        %579 = vrot.lane.b32.xlu0 %v565, 16
        %v580 = vpop.permute.xlu0 %579
        %581 = vrot.lane.b32.xlu0 %v566, 16
        %v582 = vpop.permute.xlu0 %581
        %v583 = vsel %vm411, %v580, %v582
        %v586 = vsel %vm411, 0.0, %v580
        %587 = vrot.lane.b32.xlu0 %v565, 15
        %v588 = vpop.permute.xlu0 %587
        %589 = vrot.lane.b32.xlu0 %v566, 15
        %v590 = vpop.permute.xlu0 %589
        %v591 = vsel %vm420, %v588, %v590
        %v594 = vsel %vm420, 0.0, %v588
        %v595 = vsel %vm429, %v594, 0.0
        %v596 = vsel %vm430, %v591, 0.0
        %597 = vrot.lane.b32.xlu0 %v565, 1
        %v598 = vpop.permute.xlu0 %597
        %599 = vrot.lane.b32.xlu0 %v566, 1
        %v600 = vpop.permute.xlu0 %599
        %v601 = vsel %vm437, %v598, %v600
        %v604 = vsel %vm437, 0.0, %v598
        %v605 = vsel %vm403, %v604, 0.0
        %v606 = vsel %vm404, %v601, 0.0
        %607 = vrot.lane.b32.xlu0 %v565, 127
        %v608 = vpop.permute.xlu0 %607
        %609 = vrot.lane.b32.xlu0 %v566, 127
        %v610 = vpop.permute.xlu0 %609
        %v611 = vsel %vm448, %v608, %v610
        %v614 = vsel %vm448, %v610, 0.0
        %v615 = vsel %vm429, %v611, 0.0
        %v616 = vsel %vm430, %v614, 0.0
        %617 = vrot.lane.b32.xlu0 %v565, 113
        %v618 = vpop.permute.xlu0 %617
        %619 = vrot.lane.b32.xlu0 %v566, 113
        %v620 = vpop.permute.xlu0 %619
        %v621 = vsel %vm459, %v618, %v620
        %v624 = vsel %vm459, %v620, 0.0
        %v625 = vsel %vm403, %v621, 0.0
        %v626 = vsel %vm404, %v624, 0.0
        %627 = vrot.lane.b32.xlu0 %v565, 112
        %v628 = vpop.permute.xlu0 %627
        %629 = vrot.lane.b32.xlu0 %v566, 112
        %v630 = vpop.permute.xlu0 %629
        %v631 = vsel %vm470, %v628, %v630
        %v634 = vsel %vm470, %v630, 0.0
        %635 = vrot.lane.b32.xlu0 %v565, 111
        %v636 = vpop.permute.xlu0 %635
        %637 = vrot.lane.b32.xlu0 %v566, 111
        %v638 = vpop.permute.xlu0 %637
        %v639 = vsel %vm479, %v636, %v638
        %v642 = vsel %vm479, %v638, 0.0
        %v643 = vsel %vm429, %v639, 0.0
        %v644 = vsel %vm430, %v642, 0.0
        %v645 = vld [vmem:[%s4] sm:$0xff]
        %647 = vset.pattern.permute.xlu0 0
        %648 = vperm.xlu0 %647, %v645
        %v649 = vpop.permute.xlu0 %648
        %v651 = vmul.f32 %v577, %v649
        %v652 = vmul.f32 %v578, %v649
        %s653 = scalar_lea.vmem %s4, 48
        %v654 = vld [vmem:[%s653] sm:$0xff]
        %656 = vset.pattern.permute.xlu0 0
        %657 = vperm.xlu0 %656, %v654
        %v658 = vpop.permute.xlu0 %657
        %v660 = vmul.f32 %v586, %v658
        %v661 = vmul.f32 %v583, %v658
        %v662 = vadd.f32 %v651, %v660
        %v663 = vadd.f32 %v652, %v661
        %s664 = scalar_lea.vmem %s4, 96
        %v665 = vld [vmem:[%s664] sm:$0xff]
        %667 = vset.pattern.permute.xlu0 0
        %668 = vperm.xlu0 %667, %v665
        %v669 = vpop.permute.xlu0 %668
        %v671 = vmul.f32 %v595, %v669
        %v672 = vmul.f32 %v596, %v669
        %v673 = vadd.f32 %v662, %v671
        %v674 = vadd.f32 %v663, %v672
        %s675 = scalar_lea.vmem %s4, 144
        %v676 = vld [vmem:[%s675] sm:$0xff]
        %678 = vset.pattern.permute.xlu0 0
        %679 = vperm.xlu0 %678, %v676
        %v680 = vpop.permute.xlu0 %679
        %v682 = vmul.f32 %v605, %v680
        %v683 = vmul.f32 %v606, %v680
        %v684 = vadd.f32 %v673, %v682
        %v685 = vadd.f32 %v674, %v683
        %s686 = scalar_lea.vmem %s4, 192
        %v687 = vld [vmem:[%s686] sm:$0xff]
        %689 = vset.pattern.permute.xlu0 0
        %690 = vperm.xlu0 %689, %v687
        %v691 = vpop.permute.xlu0 %690
        %v693 = vmul.f32 %v565, %v691
        %v694 = vmul.f32 %v566, %v691
        %v695 = vadd.f32 %v684, %v693
        %v696 = vadd.f32 %v685, %v694
        %s697 = scalar_lea.vmem %s4, 240
        %v698 = vld [vmem:[%s697] sm:$0xff]
        %700 = vset.pattern.permute.xlu0 0
        %701 = vperm.xlu0 %700, %v698
        %v702 = vpop.permute.xlu0 %701
        %v704 = vmul.f32 %v615, %v702
        %v705 = vmul.f32 %v616, %v702
        %v706 = vadd.f32 %v695, %v704
        %v707 = vadd.f32 %v696, %v705
        %s708 = scalar_lea.vmem %s4, 288
        %v709 = vld [vmem:[%s708] sm:$0xff]
        %711 = vset.pattern.permute.xlu0 0
        %712 = vperm.xlu0 %711, %v709
        %v713 = vpop.permute.xlu0 %712
        %v715 = vmul.f32 %v625, %v713
        %v716 = vmul.f32 %v626, %v713
        %v717 = vadd.f32 %v706, %v715
        %v718 = vadd.f32 %v707, %v716
        %s719 = scalar_lea.vmem %s4, 336
        %v720 = vld [vmem:[%s719] sm:$0xff]
        %722 = vset.pattern.permute.xlu0 0
        %723 = vperm.xlu0 %722, %v720
        %v724 = vpop.permute.xlu0 %723
        %v726 = vmul.f32 %v631, %v724
        %v727 = vmul.f32 %v634, %v724
        %v728 = vadd.f32 %v717, %v726
        %v729 = vadd.f32 %v718, %v727
        %s730 = scalar_lea.vmem %s4, 384
        %v731 = vld [vmem:[%s730] sm:$0xff]
        %733 = vset.pattern.permute.xlu0 0
        %734 = vperm.xlu0 %733, %v731
        %v735 = vpop.permute.xlu0 %734
        %v737 = vmul.f32 %v643, %v735
        %v738 = vmul.f32 %v644, %v735
        %v739 = vadd.f32 %v728, %v737
        %v740 = vadd.f32 %v729, %v738
        %v741 = vld [vmem:[%s4 + $0x8] sm:$0xff]
        %743 = vset.pattern.permute.xlu0 0
        %744 = vperm.xlu0 %743, %v741
        %v745 = vpop.permute.xlu0 %744
        %v747 = vmul.f32 %v577, %v745
        %v748 = vmul.f32 %v578, %v745
        %v749 = vld [vmem:[%s653 + $0x8] sm:$0xff]
        %751 = vset.pattern.permute.xlu0 0
        %752 = vperm.xlu0 %751, %v749
        %v753 = vpop.permute.xlu0 %752
        %v755 = vmul.f32 %v586, %v753
        %v756 = vmul.f32 %v583, %v753
        %v757 = vadd.f32 %v747, %v755
        %v758 = vadd.f32 %v748, %v756
        %v759 = vld [vmem:[%s664 + $0x8] sm:$0xff]
        %761 = vset.pattern.permute.xlu0 0
        %762 = vperm.xlu0 %761, %v759
        %v763 = vpop.permute.xlu0 %762
        %v765 = vmul.f32 %v595, %v763
        %v766 = vmul.f32 %v596, %v763
        %v767 = vadd.f32 %v757, %v765
        %v768 = vadd.f32 %v758, %v766
        %v769 = vld [vmem:[%s675 + $0x8] sm:$0xff]
        %771 = vset.pattern.permute.xlu0 0
        %772 = vperm.xlu0 %771, %v769
        %v773 = vpop.permute.xlu0 %772
        %v775 = vmul.f32 %v605, %v773
        %v776 = vmul.f32 %v606, %v773
        %v777 = vadd.f32 %v767, %v775
        %v778 = vadd.f32 %v768, %v776
        %v779 = vld [vmem:[%s686 + $0x8] sm:$0xff]
        %781 = vset.pattern.permute.xlu0 0
        %782 = vperm.xlu0 %781, %v779
        %v783 = vpop.permute.xlu0 %782
        %v785 = vmul.f32 %v565, %v783
        %v786 = vmul.f32 %v566, %v783
        %v787 = vadd.f32 %v777, %v785
        %v788 = vadd.f32 %v778, %v786
        %v789 = vld [vmem:[%s697 + $0x8] sm:$0xff]
        %791 = vset.pattern.permute.xlu0 0
        %792 = vperm.xlu0 %791, %v789
        %v793 = vpop.permute.xlu0 %792
        %v795 = vmul.f32 %v615, %v793
        %v796 = vmul.f32 %v616, %v793
        %v797 = vadd.f32 %v787, %v795
        %v798 = vadd.f32 %v788, %v796
        %v799 = vld [vmem:[%s708 + $0x8] sm:$0xff]
        %801 = vset.pattern.permute.xlu0 0
        %802 = vperm.xlu0 %801, %v799
        %v803 = vpop.permute.xlu0 %802
        %v805 = vmul.f32 %v625, %v803
        %v806 = vmul.f32 %v626, %v803
        %v807 = vadd.f32 %v797, %v805
        %v808 = vadd.f32 %v798, %v806
        %v809 = vld [vmem:[%s719 + $0x8] sm:$0xff]
        %811 = vset.pattern.permute.xlu0 0
        %812 = vperm.xlu0 %811, %v809
        %v813 = vpop.permute.xlu0 %812
        %v815 = vmul.f32 %v631, %v813
        %v816 = vmul.f32 %v634, %v813
        %v817 = vadd.f32 %v807, %v815
        %v818 = vadd.f32 %v808, %v816
        %v819 = vld [vmem:[%s730 + $0x8] sm:$0xff]
        %821 = vset.pattern.permute.xlu0 0
        %822 = vperm.xlu0 %821, %v819
        %v823 = vpop.permute.xlu0 %822
        %v825 = vmul.f32 %v643, %v823
        %v826 = vmul.f32 %v644, %v823
        %v827 = vadd.f32 %v817, %v825
        %v828 = vadd.f32 %v818, %v826
        %v829 = vld [vmem:[%s4 + $0x10] sm:$0xff]
        %831 = vset.pattern.permute.xlu0 0
        %832 = vperm.xlu0 %831, %v829
        %v833 = vpop.permute.xlu0 %832
        %v835 = vmul.f32 %v577, %v833
        %v836 = vmul.f32 %v578, %v833
        %v837 = vld [vmem:[%s653 + $0x10] sm:$0xff]
        %839 = vset.pattern.permute.xlu0 0
        %840 = vperm.xlu0 %839, %v837
        %v841 = vpop.permute.xlu0 %840
        %v843 = vmul.f32 %v586, %v841
        %v844 = vmul.f32 %v583, %v841
        %v845 = vadd.f32 %v835, %v843
        %v846 = vadd.f32 %v836, %v844
        %v847 = vld [vmem:[%s664 + $0x10] sm:$0xff]
        %849 = vset.pattern.permute.xlu0 0
        %850 = vperm.xlu0 %849, %v847
        %v851 = vpop.permute.xlu0 %850
        %v853 = vmul.f32 %v595, %v851
        %v854 = vmul.f32 %v596, %v851
        %v855 = vadd.f32 %v845, %v853
        %v856 = vadd.f32 %v846, %v854
        %v857 = vld [vmem:[%s675 + $0x10] sm:$0xff]
        %859 = vset.pattern.permute.xlu0 0
        %860 = vperm.xlu0 %859, %v857
        %v861 = vpop.permute.xlu0 %860
        %v863 = vmul.f32 %v605, %v861
        %v864 = vmul.f32 %v606, %v861
        %v865 = vadd.f32 %v855, %v863
        %v866 = vadd.f32 %v856, %v864
        %v867 = vld [vmem:[%s686 + $0x10] sm:$0xff]
        %869 = vset.pattern.permute.xlu0 0
        %870 = vperm.xlu0 %869, %v867
        %v871 = vpop.permute.xlu0 %870
        %v873 = vmul.f32 %v565, %v871
        %v874 = vmul.f32 %v566, %v871
        %v875 = vadd.f32 %v865, %v873
        %v876 = vadd.f32 %v866, %v874
        %v877 = vld [vmem:[%s697 + $0x10] sm:$0xff]
        %879 = vset.pattern.permute.xlu0 0
        %880 = vperm.xlu0 %879, %v877
        %v881 = vpop.permute.xlu0 %880
        %v883 = vmul.f32 %v615, %v881
        %v884 = vmul.f32 %v616, %v881
        %v885 = vadd.f32 %v875, %v883
        %v886 = vadd.f32 %v876, %v884
        %v887 = vld [vmem:[%s708 + $0x10] sm:$0xff]
        %889 = vset.pattern.permute.xlu0 0
        %890 = vperm.xlu0 %889, %v887
        %v891 = vpop.permute.xlu0 %890
        %v893 = vmul.f32 %v625, %v891
        %v894 = vmul.f32 %v626, %v891
        %v895 = vadd.f32 %v885, %v893
        %v896 = vadd.f32 %v886, %v894
        %v897 = vld [vmem:[%s719 + $0x10] sm:$0xff]
        %899 = vset.pattern.permute.xlu0 0
        %900 = vperm.xlu0 %899, %v897
        %v901 = vpop.permute.xlu0 %900
        %v903 = vmul.f32 %v631, %v901
        %v904 = vmul.f32 %v634, %v901
        %v905 = vadd.f32 %v895, %v903
        %v906 = vadd.f32 %v896, %v904
        %v907 = vld [vmem:[%s730 + $0x10] sm:$0xff]
        %909 = vset.pattern.permute.xlu0 0
        %910 = vperm.xlu0 %909, %v907
        %v911 = vpop.permute.xlu0 %910
        %v913 = vmul.f32 %v643, %v911
        %v914 = vmul.f32 %v644, %v911
        %v915 = vadd.f32 %v905, %v913
        %v916 = vadd.f32 %v906, %v914
        %v917 = vld [vmem:[%s4 + $0x18] sm:$0xff]
        %919 = vset.pattern.permute.xlu0 0
        %920 = vperm.xlu0 %919, %v917
        %v921 = vpop.permute.xlu0 %920
        %v923 = vmul.f32 %v577, %v921
        %v924 = vmul.f32 %v578, %v921
        %v925 = vld [vmem:[%s653 + $0x18] sm:$0xff]
        %927 = vset.pattern.permute.xlu0 0
        %928 = vperm.xlu0 %927, %v925
        %v929 = vpop.permute.xlu0 %928
        %v931 = vmul.f32 %v586, %v929
        %v932 = vmul.f32 %v583, %v929
        %v933 = vadd.f32 %v923, %v931
        %v934 = vadd.f32 %v924, %v932
        %v935 = vld [vmem:[%s664 + $0x18] sm:$0xff]
        %937 = vset.pattern.permute.xlu0 0
        %938 = vperm.xlu0 %937, %v935
        %v939 = vpop.permute.xlu0 %938
        %v941 = vmul.f32 %v595, %v939
        %v942 = vmul.f32 %v596, %v939
        %v943 = vadd.f32 %v933, %v941
        %v944 = vadd.f32 %v934, %v942
        %v945 = vld [vmem:[%s675 + $0x18] sm:$0xff]
        %947 = vset.pattern.permute.xlu0 0
        %948 = vperm.xlu0 %947, %v945
        %v949 = vpop.permute.xlu0 %948
        %v951 = vmul.f32 %v605, %v949
        %v952 = vmul.f32 %v606, %v949
        %v953 = vadd.f32 %v943, %v951
        %v954 = vadd.f32 %v944, %v952
        %v955 = vld [vmem:[%s686 + $0x18] sm:$0xff]
        %957 = vset.pattern.permute.xlu0 0
        %958 = vperm.xlu0 %957, %v955
        %v959 = vpop.permute.xlu0 %958
        %v961 = vmul.f32 %v565, %v959
        %v962 = vmul.f32 %v566, %v959
        %v963 = vadd.f32 %v953, %v961
        %v964 = vadd.f32 %v954, %v962
        %v965 = vld [vmem:[%s697 + $0x18] sm:$0xff]
        %967 = vset.pattern.permute.xlu0 0
        %968 = vperm.xlu0 %967, %v965
        %v969 = vpop.permute.xlu0 %968
        %v971 = vmul.f32 %v615, %v969
        %v972 = vmul.f32 %v616, %v969
        %v973 = vadd.f32 %v963, %v971
        %v974 = vadd.f32 %v964, %v972
        %v975 = vld [vmem:[%s708 + $0x18] sm:$0xff]
        %977 = vset.pattern.permute.xlu0 0
        %978 = vperm.xlu0 %977, %v975
        %v979 = vpop.permute.xlu0 %978
        %v981 = vmul.f32 %v625, %v979
        %v982 = vmul.f32 %v626, %v979
        %v983 = vadd.f32 %v973, %v981
        %v984 = vadd.f32 %v974, %v982
        %v985 = vld [vmem:[%s719 + $0x18] sm:$0xff]
        %987 = vset.pattern.permute.xlu0 0
        %988 = vperm.xlu0 %987, %v985
        %v989 = vpop.permute.xlu0 %988
        %v991 = vmul.f32 %v631, %v989
        %v992 = vmul.f32 %v634, %v989
        %v993 = vadd.f32 %v983, %v991
        %v994 = vadd.f32 %v984, %v992
        %v995 = vld [vmem:[%s730 + $0x18] sm:$0xff]
        %997 = vset.pattern.permute.xlu0 0
        %998 = vperm.xlu0 %997, %v995
        %v999 = vpop.permute.xlu0 %998
        %v1001 = vmul.f32 %v643, %v999
        %v1002 = vmul.f32 %v644, %v999
        %v1003 = vadd.f32 %v993, %v1001
        %v1004 = vadd.f32 %v994, %v1002
        %v1005 = vld [vmem:[%s4 + $0x20] sm:$0xff]
        %1007 = vset.pattern.permute.xlu0 0
        %1008 = vperm.xlu0 %1007, %v1005
        %v1009 = vpop.permute.xlu0 %1008
        %v1011 = vmul.f32 %v577, %v1009
        %v1012 = vmul.f32 %v578, %v1009
        %v1013 = vld [vmem:[%s653 + $0x20] sm:$0xff]
        %1015 = vset.pattern.permute.xlu0 0
        %1016 = vperm.xlu0 %1015, %v1013
        %v1017 = vpop.permute.xlu0 %1016
        %v1019 = vmul.f32 %v586, %v1017
        %v1020 = vmul.f32 %v583, %v1017
        %v1021 = vadd.f32 %v1011, %v1019
        %v1022 = vadd.f32 %v1012, %v1020
        %v1023 = vld [vmem:[%s664 + $0x20] sm:$0xff]
        %1025 = vset.pattern.permute.xlu0 0
        %1026 = vperm.xlu0 %1025, %v1023
        %v1027 = vpop.permute.xlu0 %1026
        %v1029 = vmul.f32 %v595, %v1027
        %v1030 = vmul.f32 %v596, %v1027
        %v1031 = vadd.f32 %v1021, %v1029
        %v1032 = vadd.f32 %v1022, %v1030
        %v1033 = vld [vmem:[%s675 + $0x20] sm:$0xff]
        %1035 = vset.pattern.permute.xlu0 0
        %1036 = vperm.xlu0 %1035, %v1033
        %v1037 = vpop.permute.xlu0 %1036
        %v1039 = vmul.f32 %v605, %v1037
        %v1040 = vmul.f32 %v606, %v1037
        %v1041 = vadd.f32 %v1031, %v1039
        %v1042 = vadd.f32 %v1032, %v1040
        %v1043 = vld [vmem:[%s686 + $0x20] sm:$0xff]
        %1045 = vset.pattern.permute.xlu0 0
        %1046 = vperm.xlu0 %1045, %v1043
        %v1047 = vpop.permute.xlu0 %1046
        %v1049 = vmul.f32 %v565, %v1047
        %v1050 = vmul.f32 %v566, %v1047
        %v1051 = vadd.f32 %v1041, %v1049
        %v1052 = vadd.f32 %v1042, %v1050
        %v1053 = vld [vmem:[%s697 + $0x20] sm:$0xff]
        %1055 = vset.pattern.permute.xlu0 0
        %1056 = vperm.xlu0 %1055, %v1053
        %v1057 = vpop.permute.xlu0 %1056
        %v1059 = vmul.f32 %v615, %v1057
        %v1060 = vmul.f32 %v616, %v1057
        %v1061 = vadd.f32 %v1051, %v1059
        %v1062 = vadd.f32 %v1052, %v1060
        %v1063 = vld [vmem:[%s708 + $0x20] sm:$0xff]
        %1065 = vset.pattern.permute.xlu0 0
        %1066 = vperm.xlu0 %1065, %v1063
        %v1067 = vpop.permute.xlu0 %1066
        %v1069 = vmul.f32 %v625, %v1067
        %v1070 = vmul.f32 %v626, %v1067
        %v1071 = vadd.f32 %v1061, %v1069
        %v1072 = vadd.f32 %v1062, %v1070
        %v1073 = vld [vmem:[%s719 + $0x20] sm:$0xff]
        %1075 = vset.pattern.permute.xlu0 0
        %1076 = vperm.xlu0 %1075, %v1073
        %v1077 = vpop.permute.xlu0 %1076
        %v1079 = vmul.f32 %v631, %v1077
        %v1080 = vmul.f32 %v634, %v1077
        %v1081 = vadd.f32 %v1071, %v1079
        %v1082 = vadd.f32 %v1072, %v1080
        %v1083 = vld [vmem:[%s730 + $0x20] sm:$0xff]
        %1085 = vset.pattern.permute.xlu0 0
        %1086 = vperm.xlu0 %1085, %v1083
        %v1087 = vpop.permute.xlu0 %1086
        %v1089 = vmul.f32 %v643, %v1087
        %v1090 = vmul.f32 %v644, %v1087
        %v1091 = vadd.f32 %v1081, %v1089
        %v1092 = vadd.f32 %v1082, %v1090
        %v1093 = vld [vmem:[%s4 + $0x28] sm:$0xff]
        %1095 = vset.pattern.permute.xlu0 0
        %1096 = vperm.xlu0 %1095, %v1093
        %v1097 = vpop.permute.xlu0 %1096
        %v1099 = vmul.f32 %v577, %v1097
        %v1100 = vmul.f32 %v578, %v1097
        %v1101 = vld [vmem:[%s653 + $0x28] sm:$0xff]
        %1103 = vset.pattern.permute.xlu0 0
        %1104 = vperm.xlu0 %1103, %v1101
        %v1105 = vpop.permute.xlu0 %1104
        %v1107 = vmul.f32 %v586, %v1105
        %v1108 = vmul.f32 %v583, %v1105
        %v1109 = vadd.f32 %v1099, %v1107
        %v1110 = vadd.f32 %v1100, %v1108
        %v1111 = vld [vmem:[%s664 + $0x28] sm:$0xff]
        %1113 = vset.pattern.permute.xlu0 0
        %1114 = vperm.xlu0 %1113, %v1111
        %v1115 = vpop.permute.xlu0 %1114
        %v1117 = vmul.f32 %v595, %v1115
        %v1118 = vmul.f32 %v596, %v1115
        %v1119 = vadd.f32 %v1109, %v1117
        %v1120 = vadd.f32 %v1110, %v1118
        %v1121 = vld [vmem:[%s675 + $0x28] sm:$0xff]
        %1123 = vset.pattern.permute.xlu0 0
        %1124 = vperm.xlu0 %1123, %v1121
        %v1125 = vpop.permute.xlu0 %1124
        %v1127 = vmul.f32 %v605, %v1125
        %v1128 = vmul.f32 %v606, %v1125
        %v1129 = vadd.f32 %v1119, %v1127
        %v1130 = vadd.f32 %v1120, %v1128
        %v1131 = vld [vmem:[%s686 + $0x28] sm:$0xff]
        %1133 = vset.pattern.permute.xlu0 0
        %1134 = vperm.xlu0 %1133, %v1131
        %v1135 = vpop.permute.xlu0 %1134
        %v1137 = vmul.f32 %v565, %v1135
        %v1138 = vmul.f32 %v566, %v1135
        %v1139 = vadd.f32 %v1129, %v1137
        %v1140 = vadd.f32 %v1130, %v1138
        %v1141 = vld [vmem:[%s697 + $0x28] sm:$0xff]
        %1143 = vset.pattern.permute.xlu0 0
        %1144 = vperm.xlu0 %1143, %v1141
        %v1145 = vpop.permute.xlu0 %1144
        %v1147 = vmul.f32 %v615, %v1145
        %v1148 = vmul.f32 %v616, %v1145
        %v1149 = vadd.f32 %v1139, %v1147
        %v1150 = vadd.f32 %v1140, %v1148
        %v1151 = vld [vmem:[%s708 + $0x28] sm:$0xff]
        %1153 = vset.pattern.permute.xlu0 0
        %1154 = vperm.xlu0 %1153, %v1151
        %v1155 = vpop.permute.xlu0 %1154
        %v1157 = vmul.f32 %v625, %v1155
        %v1158 = vmul.f32 %v626, %v1155
        %v1159 = vadd.f32 %v1149, %v1157
        %v1160 = vadd.f32 %v1150, %v1158
        %v1161 = vld [vmem:[%s719 + $0x28] sm:$0xff]
        %1163 = vset.pattern.permute.xlu0 0
        %1164 = vperm.xlu0 %1163, %v1161
        %v1165 = vpop.permute.xlu0 %1164
        %v1167 = vmul.f32 %v631, %v1165
        %v1168 = vmul.f32 %v634, %v1165
        %v1169 = vadd.f32 %v1159, %v1167
        %v1170 = vadd.f32 %v1160, %v1168
        %v1171 = vld [vmem:[%s730 + $0x28] sm:$0xff]
        %1173 = vset.pattern.permute.xlu0 0
        %1174 = vperm.xlu0 %1173, %v1171
        %v1175 = vpop.permute.xlu0 %1174
        %v1177 = vmul.f32 %v643, %v1175
        %v1178 = vmul.f32 %v644, %v1175
        %v1179 = vadd.f32 %v1169, %v1177
        %v1180 = vadd.f32 %v1170, %v1178
        %v1181 = vld [vmem:[%s5] sm:$0xff]
        %v1182 = vld [vmem:[%s5 + $0x8] sm:$0xff]
        %v1183 = vld [vmem:[%s5 + $0x10] sm:$0xff]
        %v1184 = vld [vmem:[%s5 + $0x18] sm:$0xff]
        %v1185 = vld [vmem:[%s5 + $0x20] sm:$0xff]
        %v1186 = vld [vmem:[%s5 + $0x28] sm:$0xff]
        %1188 = vset.pattern.permute.xlu0 0
        %1189 = vperm.xlu0 %1188, %v1181
        %v1190 = vpop.permute.xlu0 %1189
        %1193 = vset.pattern.permute.xlu0 0
        %1194 = vperm.xlu0 %1193, %v1182
        %v1195 = vpop.permute.xlu0 %1194
        %1198 = vset.pattern.permute.xlu0 0
        %1199 = vperm.xlu0 %1198, %v1183
        %v1200 = vpop.permute.xlu0 %1199
        %1203 = vset.pattern.permute.xlu0 0
        %1204 = vperm.xlu0 %1203, %v1184
        %v1205 = vpop.permute.xlu0 %1204
        %1208 = vset.pattern.permute.xlu0 0
        %1209 = vperm.xlu0 %1208, %v1185
        %v1210 = vpop.permute.xlu0 %1209
        %1213 = vset.pattern.permute.xlu0 0
        %1214 = vperm.xlu0 %1213, %v1186
        %v1215 = vpop.permute.xlu0 %1214
        %v1217 = vmul.f32 %v739, %v1190
        %v1218 = vmul.f32 %v740, %v1190
        %v1219 = vmul.f32 %v827, %v1195
        %v1220 = vmul.f32 %v828, %v1195
        %v1221 = vmul.f32 %v915, %v1200
        %v1222 = vmul.f32 %v916, %v1200
        %v1223 = vmul.f32 %v1003, %v1205
        %v1224 = vmul.f32 %v1004, %v1205
        %v1225 = vmul.f32 %v1091, %v1210
        %v1226 = vmul.f32 %v1092, %v1210
        %v1227 = vmul.f32 %v1179, %v1215
        %v1228 = vmul.f32 %v1180, %v1215
        %v1229 = vld [vmem:[%s6] sm:$0xff]
        %v1230 = vld [vmem:[%s6 + $0x8] sm:$0xff]
        %v1231 = vld [vmem:[%s6 + $0x10] sm:$0xff]
        %v1232 = vld [vmem:[%s6 + $0x18] sm:$0xff]
        %v1233 = vld [vmem:[%s6 + $0x20] sm:$0xff]
        %v1234 = vld [vmem:[%s6 + $0x28] sm:$0xff]
        %1236 = vset.pattern.permute.xlu0 0
        %1237 = vperm.xlu0 %1236, %v1229
        %v1238 = vpop.permute.xlu0 %1237
        %1241 = vset.pattern.permute.xlu0 0
        %1242 = vperm.xlu0 %1241, %v1230
        %v1243 = vpop.permute.xlu0 %1242
        %1246 = vset.pattern.permute.xlu0 0
        %1247 = vperm.xlu0 %1246, %v1231
        %v1248 = vpop.permute.xlu0 %1247
        %1251 = vset.pattern.permute.xlu0 0
        %1252 = vperm.xlu0 %1251, %v1232
        %v1253 = vpop.permute.xlu0 %1252
        %1256 = vset.pattern.permute.xlu0 0
        %1257 = vperm.xlu0 %1256, %v1233
        %v1258 = vpop.permute.xlu0 %1257
        %1261 = vset.pattern.permute.xlu0 0
        %1262 = vperm.xlu0 %1261, %v1234
        %v1263 = vpop.permute.xlu0 %1262
        %v1265 = vadd.f32 %v1217, %v1238
        %v1266 = vadd.f32 %v1218, %v1238
        %v1267 = vadd.f32 %v1219, %v1243
        %v1268 = vadd.f32 %v1220, %v1243
        %v1269 = vadd.f32 %v1221, %v1248
        %v1270 = vadd.f32 %v1222, %v1248
        %v1271 = vadd.f32 %v1223, %v1253
        %v1272 = vadd.f32 %v1224, %v1253
        %v1273 = vadd.f32 %v1225, %v1258
        %v1274 = vadd.f32 %v1226, %v1258
        %v1275 = vadd.f32 %v1227, %v1263
        %v1276 = vadd.f32 %v1228, %v1263
        %v1277 = vld [vmem:[%s7] sm:$0xf]
        %v1278 = vpack.c.bf16 %v1267, %v1265
        %v1279 = vpack.c.bf16 %v1268, %v1266
        %v1280 = vpack.c.bf16 %v1271, %v1269
        %v1281 = vpack.c.bf16 %v1272, %v1270
        %v1282 = vpack.c.bf16 %v1275, %v1273
        %v1283 = vpack.c.bf16 %v1276, %v1274
        %vm1284 = vcmask 392192
        %v1286 = vsel %vm1284, %v1277, 0
        %1288 = vmatprep.subr.bf16.mxu0 %v1279
        %1289 = vmatpush1.bf16.msra.mxu0 %v1278
        %1290 = vmatprep.subr.bf16.mxu0 %v1281
        %1291 = vmatpush1.bf16.msra.mxu0 %v1280
        %1292 = vmatprep.subr.bf16.mxu0 %v1283
        %1293 = vmatpush1.bf16.msra.mxu0 %v1282
        %1294 = vmatprep.subr.bf16.mxu0 0
        %1295 = vmatpush1.bf16.msra.mxu0 0
        %1296 = vmatprep.subr.bf16.mxu0 0
        %1297 = vmatpush1.bf16.msra.mxu0 0
        %1298 = vmatprep.subr.bf16.mxu0 0
        %1299 = vmatpush1.bf16.msra.mxu0 0
        %1300 = vmatprep.subr.bf16.mxu0 0
        %1301 = vmatpush1.bf16.msra.mxu0 0
        %1302 = vmatprep.subr.bf16.mxu0 0
        %1303 = vmatpush1.bf16.msra.mxu0 0
        %1304 = vmatprep.subr.bf16.mxu0 0
        %1305 = vmatpush1.bf16.msra.mxu0 0
        %1306 = vmatprep.subr.bf16.mxu0 0
        %1307 = vmatpush1.bf16.msra.mxu0 0
        %1308 = vmatprep.subr.bf16.mxu0 0
        %1309 = vmatpush1.bf16.msra.mxu0 0
        %1310 = vmatprep.subr.bf16.mxu0 0
        %1311 = vmatpush1.bf16.msra.mxu0 0
        %1312 = vmatprep.subr.bf16.mxu0 0
        %1313 = vmatpush1.bf16.msra.mxu0 0
        %1314 = vmatprep.subr.bf16.mxu0 0
        %1315 = vmatpush1.bf16.msra.mxu0 0
        %1316 = vmatprep.subr.bf16.mxu0 0
        %1317 = vmatpush1.bf16.msra.mxu0 0
        %1318 = vmatprep.subr.bf16.mxu0 0
        %1319 = vmatpush1.bf16.msra.mxu0 0
        %1320 = vmatprep.mubr.bf16.mxu0 0
        %1321 = vmatmul.mubr.bf16.gmra.mrb[0].mxu0 %v1286
        %v1322 = vpop.f32.mrb[0].mxu0
        %v1323 = vadd.f32 0.0, %v1322
        %v1324 = vpop.f32.mrb[0].mxu0
        %v1325 = vadd.f32 0.0, %v1324
        %v1326 = vpop.f32.mrb[0].mxu0
        %v1327 = vpop.f32.mrb[0].mxu0
        %1328 = vdwg.mxu0
        %v1329 = vld [vmem:[%s8] sm:$0xff]
        %1331 = vset.pattern.permute.xlu0 0
        %1332 = vperm.xlu0 %1331, %v1329
        %v1333 = vpop.permute.xlu0 %1332
        %v1335 = vmul.f32 %v1323, %v1333
        %v1336 = vmul.f32 %v1325, %v1333
        %v1337 = vld [vmem:[%s9] sm:$0xff]
        %1339 = vset.pattern.permute.xlu0 0
        %1340 = vperm.xlu0 %1339, %v1337
        %v1341 = vpop.permute.xlu0 %1340
        %v1343 = vadd.f32 %v1335, %v1341
        %v1344 = vadd.f32 %v1336, %v1341
        %v1345 = vadd.f32 %v1343, %v359
        %v1346 = vadd.f32 %v1344, %v360
        %v1347 = vmax.f32 %v1345, 0.0
        %v1348 = vmax.f32 %v1346, 0.0
        %1349 = vst [vmem:[%s352] sm:$0xff] %v1347
        %1350 = vst [vmem:[%s352 + $0x8] sm:$0xff] %v1348
        %s1351 = sand.u32 %s247, 1
        %s1352 = scalar_lea.sflag [#allocation3], %s1351
        %s1353 = sand.u32 %s247, 1
        %s1354 = smul.addr %s1353, 16
        %s1355 = scalar_lea.vmem [#allocation2], %s1354
        // Predicated region
        $region61: #{tpu_custom_call.1} parent=59 // pred_check
          %p1356 = pneg %p257
        $region62: #{tpu_custom_call.1} parent=59 // pred_check_branch
          %1358 = sbr.rel (%p1356) target = $region64
        $region63: #{tpu_custom_call.1} parent=59 // pred_region
          %s1360 = ssub.s32 256, 256
          %1361 = vsyncadd %s1352, %s1360
          %s1362 = smul.addr %s24, 2
          %s1363 = smul.addr %s1362, 128
          %s1364 = scalar_lea.hbm %s10, %s1363
          %s1366 = sshll.u32 %s1355, 4
          %s1367 = int_to_ptr.vmem [resolvable:$true] %s1366
          %1369 = dma.vmem_to_hbm [thread:$0]  %s1367, 256, %s1364, %s1352
        $region64: #{tpu_custom_call.1} parent=59 // pred_fallthru
          _
      $region60: #{tpu_custom_call.1} parent=5 // pred_fallthru
        _
      %p1370 = scmp.le.s32.totalorder 2, %s19
      // Predicated region
      $region65: #{tpu_custom_call.1} parent=5 // pred_check
        %p1371 = pneg %p1370
      $region66: #{tpu_custom_call.1} parent=5 // pred_check_branch
        %1373 = sbr.rel (%p1371) target = $region68
      $region67: #{tpu_custom_call.1} parent=5 // pred_region
        %s1374 = ssub.s32 %s19, 2
        // Predicated region
        $region69: #{tpu_custom_call.1} parent=67 // pred_check
          %p1375 = pneg %p263
        $region70: #{tpu_custom_call.1} parent=67 // pred_check_branch
          %1377 = sbr.rel (%p1375) target = $region72
        $region71: #{tpu_custom_call.1} parent=67 // pred_region
          %s1378 = sand.u32 %s248, 1
          %s1379 = scalar_lea.sflag [#allocation3], %s1378
          %s1380 = sand.u32 %s248, 1
          %s1381 = smul.addr %s1380, 16
          %s1382 = scalar_lea.vmem [#allocation2], %s1381
          %1383 = dma.done %s1379, 256
        $region72: #{tpu_custom_call.1} parent=67 // pred_fallthru
          _
      $region68: #{tpu_custom_call.1} parent=5 // pred_fallthru
        _
    $region6: #{tpu_custom_call.1} parent=1 // loop_footer
      %s23 = sadd.s32 1, %s19
    $region7: #{tpu_custom_call.1} parent=1 // loop_footer_branch
      %18 = sbr.rel target = $region3
    $region8: #{tpu_custom_call.1} parent=1 // loop_exit
      _
    %1384 = vsyncpa [#allocation3], 1
    %s1385 = scalar_lea.sflag [#allocation3], 1
    %1386 = vsyncpa %s1385, 1

</llo_original>
